<compile_context>
chip_gen: v6e
topology: v6e:2x2x1
jax: 0.10.0
libtpu: 0.0.40
codegen_flags: <defaults>
</compile_context>

<pallas_src>
import functools

import jax
import jax.numpy as jnp
from jax import lax
from jax.experimental import pallas as pl
from jax.experimental.pallas import tpu as pltpu


def lstm_kernel(x_ref, w_ih_t_ref, w_hh_t_ref, b_ref, fc_w_t_ref, fc_b_ref,
                h0_ref, c0_ref,
                out_ref, hn_ref, cn_ref,
                gx_ref, *, seq_len, batch, hidden_size):
    H = hidden_size
    B = batch

    # ---- Hoisted input projection (no sequential dependency) ----------------
    # All S timesteps as ONE MXU matmul: (S*B, I) @ (I, 4H) + fused bias.
    gx_ref[...] = (
        jnp.dot(x_ref[...], w_ih_t_ref[...], preferred_element_type=jnp.float32)
        + b_ref[...])

    # Recurrent weight loaded once; stays resident across the unrolled loop.
    w_hh_t = w_hh_t_ref[...]                              # (H, 4H)

    h0 = h0_ref[...].astype(jnp.float32)                  # (B, H) initial hidden
    c0 = c0_ref[...].astype(jnp.float32)                  # (B, H) initial cell

    def step(t, carry):
        h, c = carry
        row = pl.multiple_of(t * B, B)                    # B is a multiple of 8
        gates = gx_ref[pl.ds(row, B), :] + jnp.dot(
            h, w_hh_t, preferred_element_type=jnp.float32)  # (B, 4H)
        # Gate order permuted host-side to (i, f, o, g): one sigmoid over a
        # contiguous 3H lane slice + one tanh instead of four separate slices.
        ifo = jax.nn.sigmoid(gates[:, :3 * H])
        g_g = jnp.tanh(gates[:, 3 * H:])
        i_g = ifo[:, 0 * H:1 * H]
        f_g = ifo[:, 1 * H:2 * H]
        o_g = ifo[:, 2 * H:3 * H]
        c_new = f_g * c + i_g * g_g
        h_new = o_g * jnp.tanh(c_new)
        return h_new, c_new

    h, c = lax.fori_loop(0, seq_len, step, (h0, c0), unroll=seq_len <= 32)

    hn_ref[...] = h.astype(hn_ref.dtype)
    cn_ref[...] = c.astype(cn_ref.dtype)

    # ---- fc(out[-1]) + log_softmax(dim=1) ------------------------------------
    logits = (jnp.dot(h, fc_w_t_ref[...], preferred_element_type=jnp.float32)
              + fc_b_ref[...])                            # (B, O)
    m = jnp.max(logits, axis=1, keepdims=True)
    shifted = logits - m
    lse = jnp.log(jnp.sum(jnp.exp(shifted), axis=1, keepdims=True))
    out_ref[...] = (shifted - lse).astype(out_ref.dtype)


def lstm_forward(x, w_ih, w_hh, b_ih, b_hh, fc_w, fc_b, hidden=None):
    """x: (S, B, I) f32, params in PyTorch nn.LSTM / nn.Linear layout.

    Returns (log_softmax(fc(h_last), axis=1) of shape (B, O), (h_n, c_n)),
    mirroring the PyTorch module which threads self.hidden across calls.
    `hidden=None` corresponds to init_hidden() (zeros).
    """
    S, B, I = x.shape
    H4 = w_ih.shape[0]
    H = H4 // 4
    O = fc_w.shape[0]

    if hidden is None:
        h0 = jnp.zeros((B, H), jnp.float32)
        c0 = jnp.zeros((B, H), jnp.float32)
    else:
        h0, c0 = hidden
        h0 = jnp.asarray(h0, jnp.float32).reshape(B, H)
        c0 = jnp.asarray(c0, jnp.float32).reshape(B, H)

    # Pad batch to a sublane multiple (8) so per-timestep slices of the hoisted
    # projection are vreg-aligned; padded rows are dropped at the end.
    B_pad = max(8, -(-B // 8) * 8)
    if B_pad != B:
        x = jnp.pad(x, ((0, 0), (0, B_pad - B), (0, 0)))
        h0 = jnp.pad(h0, ((0, B_pad - B), (0, 0)))
        c0 = jnp.pad(c0, ((0, B_pad - B), (0, 0)))

    # PyTorch packs gates as (i, f, g, o) along the 4H axis; permute to
    # (i, f, o, g) so the three sigmoid gates are one contiguous lane slice.
    perm = jnp.concatenate([jnp.arange(0, 2 * H),
                            jnp.arange(3 * H, 4 * H),
                            jnp.arange(2 * H, 3 * H)])
    w_ih_t = w_ih[perm].T                        # (I, 4H)  pre-transposed
    w_hh_t = w_hh[perm].T                        # (H, 4H)  pre-transposed
    b = (b_ih + b_hh)[perm].reshape(1, H4)       # biases pre-summed
    fc_w_t = fc_w.T                              # (H, O)
    fc_b2 = fc_b.reshape(1, O)

    # Merge time into the row axis so the input projection is a single matmul.
    x2 = x.reshape(S * B_pad, I)

    kernel = functools.partial(lstm_kernel, seq_len=S, batch=B_pad, hidden_size=H)

    logp, h_n, c_n = pl.pallas_call(
        kernel,
        out_shape=(jax.ShapeDtypeStruct((B_pad, O), jnp.float32),
                   jax.ShapeDtypeStruct((B_pad, H), jnp.float32),
                   jax.ShapeDtypeStruct((B_pad, H), jnp.float32)),
        # Single invocation (no time grid): everything fits in VMEM; the
        # recurrence runs as an in-kernel unrolled fori_loop with h/c in vregs.
        scratch_shapes=[pltpu.VMEM((S * B_pad, H4), jnp.float32)],  # x-projection
    )(x2, w_ih_t, w_hh_t, b, fc_w_t, fc_b2, h0, c0)

    return logp[:B], (h_n[:B], c_n[:B])


def lstm_reference(x, w_ih, w_hh, b_ih, b_hh, fc_w, fc_b):
    """Plain-JAX reference of the same forward pass (PyTorch gate order)."""
    S, B, I = x.shape
    H = w_hh.shape[1]
    h = jnp.zeros((B, H), jnp.float32)
    c = jnp.zeros((B, H), jnp.float32)
    for t in range(S):
        gates = x[t] @ w_ih.T + h @ w_hh.T + b_ih + b_hh
        i = jax.nn.sigmoid(gates[:, 0 * H:1 * H])
        f = jax.nn.sigmoid(gates[:, 1 * H:2 * H])
        g = jnp.tanh(gates[:, 2 * H:3 * H])
        o = jax.nn.sigmoid(gates[:, 3 * H:4 * H])
        c = f * c + i * g
        h = o * jnp.tanh(c)
    logits = h @ fc_w.T + fc_b
    return jax.nn.log_softmax(logits, axis=1), h, c


if __name__ == "__main__":
    # Small shapes consistent with the module: num_layers=1, seq-major input.
    SEQ, BATCH, INPUT, HIDDEN, OUTPUT = 8, 2, 16, 32, 10

    key = jax.random.PRNGKey(0)
    keys = jax.random.split(key, 8)
    bound = 1.0 / (HIDDEN ** 0.5)   # PyTorch default uniform init range

    x = jax.random.normal(keys[0], (SEQ, BATCH, INPUT), dtype=jnp.float32)
    w_ih = jax.random.uniform(keys[1], (4 * HIDDEN, INPUT), jnp.float32, -bound, bound)
    w_hh = jax.random.uniform(keys[2], (4 * HIDDEN, HIDDEN), jnp.float32, -bound, bound)
    b_ih = jax.random.uniform(keys[3], (4 * HIDDEN,), jnp.float32, -bound, bound)
    b_hh = jax.random.uniform(keys[4], (4 * HIDDEN,), jnp.float32, -bound, bound)
    fc_w = jax.random.uniform(keys[5], (OUTPUT, HIDDEN), jnp.float32, -bound, bound)
    fc_b = jax.random.uniform(keys[6], (OUTPUT,), jnp.float32, -bound, bound)

    (out, (h_n, c_n)) = lstm_forward(x, w_ih, w_hh, b_ih, b_hh, fc_w, fc_b)
    out = jax.block_until_ready(out)

    ref_out, ref_h, ref_c = lstm_reference(x, w_ih, w_hh, b_ih, b_hh, fc_w, fc_b)
    assert out.shape == (BATCH, OUTPUT)
    assert jnp.allclose(out, ref_out, atol=1e-5, rtol=1e-5), "log-probs mismatch vs reference"
    assert jnp.allclose(h_n, ref_h, atol=1e-5, rtol=1e-5), "h_n mismatch vs reference"
    assert jnp.allclose(c_n, ref_c, atol=1e-5, rtol=1e-5), "c_n mismatch vs reference"

    print("KERNEL_OK")
</pallas_src>

<mosaic_0001>
module attributes {stable_mosaic.version = 11 : i64} {
  func.func @lstm_kernel(%arg0: memref<64x16xf32, #tpu.memory_space<vmem>>, %arg1: memref<16x128xf32, #tpu.memory_space<vmem>>, %arg2: memref<32x128xf32, #tpu.memory_space<vmem>>, %arg3: memref<1x128xf32, #tpu.memory_space<vmem>>, %arg4: memref<32x10xf32, #tpu.memory_space<vmem>>, %arg5: memref<1x10xf32, #tpu.memory_space<vmem>>, %arg6: memref<8x32xf32, #tpu.memory_space<vmem>>, %arg7: memref<8x32xf32, #tpu.memory_space<vmem>>, %arg8: memref<8x10xf32, #tpu.memory_space<vmem>>, %arg9: memref<8x32xf32, #tpu.memory_space<vmem>>, %arg10: memref<8x32xf32, #tpu.memory_space<vmem>>, %arg11: memref<64x128xf32, #tpu.memory_space<vmem>>) attributes {dimension_semantics = [], scalar_prefetch = 0 : i64, scratch_operands = 1 : i64, tpu.core_type = #tpu.core_type<tc>} {
    %c0 = arith.constant 0 : index
    %c0_0 = arith.constant 0 : index
    %0 = vector.load %arg0[%c0, %c0_0] : memref<64x16xf32, #tpu.memory_space<vmem>>, vector<64x16xf32>
    %c0_1 = arith.constant 0 : index
    %c0_2 = arith.constant 0 : index
    %1 = vector.load %arg1[%c0_1, %c0_2] : memref<16x128xf32, #tpu.memory_space<vmem>>, vector<16x128xf32>
    %cst = arith.constant dense<0.000000e+00> : vector<64x128xf32>
    %2 = tpu.matmul %0, %1, %cst {dimension_numbers = #tpu.dot_dimension_numbers<[1], [0], [0], [1], [0, 0, 1, 1], [], []>} : vector<64x16xf32>, vector<16x128xf32>, vector<64x128xf32> -> vector<64x128xf32>
    %c0_3 = arith.constant 0 : index
    %c0_4 = arith.constant 0 : index
    %3 = vector.load %arg3[%c0_3, %c0_4] : memref<1x128xf32, #tpu.memory_space<vmem>>, vector<1x128xf32>
    %4 = vector.broadcast %3 : vector<1x128xf32> to vector<64x128xf32>
    %5 = arith.addf %2, %4 : vector<64x128xf32>
    %c0_5 = arith.constant 0 : index
    %c0_6 = arith.constant 0 : index
    %6 = vector.load %arg11[%c0_5, %c0_6] : memref<64x128xf32, #tpu.memory_space<vmem>>, vector<64x128xf32>
    tpu.vector_store %arg11[%c0_5, %c0_6], %5 {strides = array<i32>} : memref<64x128xf32, #tpu.memory_space<vmem>>, vector<64x128xf32>,
    %c0_7 = arith.constant 0 : index
    %c0_8 = arith.constant 0 : index
    %7 = vector.load %arg2[%c0_7, %c0_8] : memref<32x128xf32, #tpu.memory_space<vmem>>, vector<32x128xf32>
    %c0_9 = arith.constant 0 : index
    %c0_10 = arith.constant 0 : index
    %8 = vector.load %arg6[%c0_9, %c0_10] : memref<8x32xf32, #tpu.memory_space<vmem>>, vector<8x32xf32>
    %c0_11 = arith.constant 0 : index
    %c0_12 = arith.constant 0 : index
    %9 = vector.load %arg7[%c0_11, %c0_12] : memref<8x32xf32, #tpu.memory_space<vmem>>, vector<8x32xf32>
    %c0_i32 = arith.constant 0 : i32
    %c8_i32 = arith.constant 8 : i32
    %10 = arith.muli %c0_i32, %c8_i32 : i32
    %11 = tpu.assume_multiple %10, 8 : i32
    %12 = arith.index_cast %11 : i32 to index
    %c0_13 = arith.constant 0 : index
    %13 = vector.load %arg11[%12, %c0_13] : memref<64x128xf32, #tpu.memory_space<vmem>>, vector<8x128xf32>
    %cst_14 = arith.constant dense<0.000000e+00> : vector<8x128xf32>
    %14 = tpu.matmul %8, %7, %cst_14 {dimension_numbers = #tpu.dot_dimension_numbers<[1], [0], [0], [1], [0, 0, 1, 1], [], []>} : vector<8x32xf32>, vector<32x128xf32>, vector<8x128xf32> -> vector<8x128xf32>
    %15 = arith.addf %13, %14 : vector<8x128xf32>
    %16 = vector.extract_strided_slice %15 {offsets = [0, 0], sizes = [8, 96], strides = [1, 1]} : vector<8x128xf32> to vector<8x96xf32>
    %17 = arith.negf %16 : vector<8x96xf32>
    %18 = math.exp %17 : vector<8x96xf32>
    %cst_15 = arith.constant 1.000000e+00 : f32
    %19 = vector.broadcast %cst_15 : f32 to vector<8x96xf32>
    %20 = arith.addf %19, %18 : vector<8x96xf32>
    %21 = arith.divf %19, %20 : vector<8x96xf32>
    %22 = vector.extract_strided_slice %15 {offsets = [0, 96], sizes = [8, 32], strides = [1, 1]} : vector<8x128xf32> to vector<8x32xf32>
    %23 = math.tanh %22 : vector<8x32xf32>
    %24 = vector.extract_strided_slice %21 {offsets = [0, 0], sizes = [8, 32], strides = [1, 1]} : vector<8x96xf32> to vector<8x32xf32>
    %25 = vector.extract_strided_slice %21 {offsets = [0, 32], sizes = [8, 32], strides = [1, 1]} : vector<8x96xf32> to vector<8x32xf32>
    %26 = vector.extract_strided_slice %21 {offsets = [0, 64], sizes = [8, 32], strides = [1, 1]} : vector<8x96xf32> to vector<8x32xf32>
    %27 = arith.mulf %25, %9 : vector<8x32xf32>
    %28 = arith.mulf %24, %23 : vector<8x32xf32>
    %29 = arith.addf %27, %28 : vector<8x32xf32>
    %30 = math.tanh %29 : vector<8x32xf32>
    %31 = arith.mulf %26, %30 : vector<8x32xf32>
    %c1_i32 = arith.constant 1 : i32
    %c8_i32_16 = arith.constant 8 : i32
    %32 = arith.muli %c1_i32, %c8_i32_16 : i32
    %33 = tpu.assume_multiple %32, 8 : i32
    %34 = arith.index_cast %33 : i32 to index
    %c0_17 = arith.constant 0 : index
    %35 = vector.load %arg11[%34, %c0_17] : memref<64x128xf32, #tpu.memory_space<vmem>>, vector<8x128xf32>
    %cst_18 = arith.constant dense<0.000000e+00> : vector<8x128xf32>
    %36 = tpu.matmul %31, %7, %cst_18 {dimension_numbers = #tpu.dot_dimension_numbers<[1], [0], [0], [1], [0, 0, 1, 1], [], []>} : vector<8x32xf32>, vector<32x128xf32>, vector<8x128xf32> -> vector<8x128xf32>
    %37 = arith.addf %35, %36 : vector<8x128xf32>
    %38 = vector.extract_strided_slice %37 {offsets = [0, 0], sizes = [8, 96], strides = [1, 1]} : vector<8x128xf32> to vector<8x96xf32>
    %39 = arith.negf %38 : vector<8x96xf32>
    %40 = math.exp %39 : vector<8x96xf32>
    %cst_19 = arith.constant 1.000000e+00 : f32
    %41 = vector.broadcast %cst_19 : f32 to vector<8x96xf32>
    %42 = arith.addf %41, %40 : vector<8x96xf32>
    %43 = arith.divf %41, %42 : vector<8x96xf32>
    %44 = vector.extract_strided_slice %37 {offsets = [0, 96], sizes = [8, 32], strides = [1, 1]} : vector<8x128xf32> to vector<8x32xf32>
    %45 = math.tanh %44 : vector<8x32xf32>
    %46 = vector.extract_strided_slice %43 {offsets = [0, 0], sizes = [8, 32], strides = [1, 1]} : vector<8x96xf32> to vector<8x32xf32>
    %47 = vector.extract_strided_slice %43 {offsets = [0, 32], sizes = [8, 32], strides = [1, 1]} : vector<8x96xf32> to vector<8x32xf32>
    %48 = vector.extract_strided_slice %43 {offsets = [0, 64], sizes = [8, 32], strides = [1, 1]} : vector<8x96xf32> to vector<8x32xf32>
    %49 = arith.mulf %47, %29 : vector<8x32xf32>
    %50 = arith.mulf %46, %45 : vector<8x32xf32>
    %51 = arith.addf %49, %50 : vector<8x32xf32>
    %52 = math.tanh %51 : vector<8x32xf32>
    %53 = arith.mulf %48, %52 : vector<8x32xf32>
    %c2_i32 = arith.constant 2 : i32
    %c8_i32_20 = arith.constant 8 : i32
    %54 = arith.muli %c2_i32, %c8_i32_20 : i32
    %55 = tpu.assume_multiple %54, 8 : i32
    %56 = arith.index_cast %55 : i32 to index
    %c0_21 = arith.constant 0 : index
    %57 = vector.load %arg11[%56, %c0_21] : memref<64x128xf32, #tpu.memory_space<vmem>>, vector<8x128xf32>
    %cst_22 = arith.constant dense<0.000000e+00> : vector<8x128xf32>
    %58 = tpu.matmul %53, %7, %cst_22 {dimension_numbers = #tpu.dot_dimension_numbers<[1], [0], [0], [1], [0, 0, 1, 1], [], []>} : vector<8x32xf32>, vector<32x128xf32>, vector<8x128xf32> -> vector<8x128xf32>
    %59 = arith.addf %57, %58 : vector<8x128xf32>
    %60 = vector.extract_strided_slice %59 {offsets = [0, 0], sizes = [8, 96], strides = [1, 1]} : vector<8x128xf32> to vector<8x96xf32>
    %61 = arith.negf %60 : vector<8x96xf32>
    %62 = math.exp %61 : vector<8x96xf32>
    %cst_23 = arith.constant 1.000000e+00 : f32
    %63 = vector.broadcast %cst_23 : f32 to vector<8x96xf32>
    %64 = arith.addf %63, %62 : vector<8x96xf32>
    %65 = arith.divf %63, %64 : vector<8x96xf32>
    %66 = vector.extract_strided_slice %59 {offsets = [0, 96], sizes = [8, 32], strides = [1, 1]} : vector<8x128xf32> to vector<8x32xf32>
    %67 = math.tanh %66 : vector<8x32xf32>
    %68 = vector.extract_strided_slice %65 {offsets = [0, 0], sizes = [8, 32], strides = [1, 1]} : vector<8x96xf32> to vector<8x32xf32>
    %69 = vector.extract_strided_slice %65 {offsets = [0, 32], sizes = [8, 32], strides = [1, 1]} : vector<8x96xf32> to vector<8x32xf32>
    %70 = vector.extract_strided_slice %65 {offsets = [0, 64], sizes = [8, 32], strides = [1, 1]} : vector<8x96xf32> to vector<8x32xf32>
    %71 = arith.mulf %69, %51 : vector<8x32xf32>
    %72 = arith.mulf %68, %67 : vector<8x32xf32>
    %73 = arith.addf %71, %72 : vector<8x32xf32>
    %74 = math.tanh %73 : vector<8x32xf32>
    %75 = arith.mulf %70, %74 : vector<8x32xf32>
    %c3_i32 = arith.constant 3 : i32
    %c8_i32_24 = arith.constant 8 : i32
    %76 = arith.muli %c3_i32, %c8_i32_24 : i32
    %77 = tpu.assume_multiple %76, 8 : i32
    %78 = arith.index_cast %77 : i32 to index
    %c0_25 = arith.constant 0 : index
    %79 = vector.load %arg11[%78, %c0_25] : memref<64x128xf32, #tpu.memory_space<vmem>>, vector<8x128xf32>
    %cst_26 = arith.constant dense<0.000000e+00> : vector<8x128xf32>
    %80 = tpu.matmul %75, %7, %cst_26 {dimension_numbers = #tpu.dot_dimension_numbers<[1], [0], [0], [1], [0, 0, 1, 1], [], []>} : vector<8x32xf32>, vector<32x128xf32>, vector<8x128xf32> -> vector<8x128xf32>
    %81 = arith.addf %79, %80 : vector<8x128xf32>
    %82 = vector.extract_strided_slice %81 {offsets = [0, 0], sizes = [8, 96], strides = [1, 1]} : vector<8x128xf32> to vector<8x96xf32>
    %83 = arith.negf %82 : vector<8x96xf32>
    %84 = math.exp %83 : vector<8x96xf32>
    %cst_27 = arith.constant 1.000000e+00 : f32
    %85 = vector.broadcast %cst_27 : f32 to vector<8x96xf32>
    %86 = arith.addf %85, %84 : vector<8x96xf32>
    %87 = arith.divf %85, %86 : vector<8x96xf32>
    %88 = vector.extract_strided_slice %81 {offsets = [0, 96], sizes = [8, 32], strides = [1, 1]} : vector<8x128xf32> to vector<8x32xf32>
    %89 = math.tanh %88 : vector<8x32xf32>
    %90 = vector.extract_strided_slice %87 {offsets = [0, 0], sizes = [8, 32], strides = [1, 1]} : vector<8x96xf32> to vector<8x32xf32>
    %91 = vector.extract_strided_slice %87 {offsets = [0, 32], sizes = [8, 32], strides = [1, 1]} : vector<8x96xf32> to vector<8x32xf32>
    %92 = vector.extract_strided_slice %87 {offsets = [0, 64], sizes = [8, 32], strides = [1, 1]} : vector<8x96xf32> to vector<8x32xf32>
    %93 = arith.mulf %91, %73 : vector<8x32xf32>
    %94 = arith.mulf %90, %89 : vector<8x32xf32>
    %95 = arith.addf %93, %94 : vector<8x32xf32>
    %96 = math.tanh %95 : vector<8x32xf32>
    %97 = arith.mulf %92, %96 : vector<8x32xf32>
    %c4_i32 = arith.constant 4 : i32
    %c8_i32_28 = arith.constant 8 : i32
    %98 = arith.muli %c4_i32, %c8_i32_28 : i32
    %99 = tpu.assume_multiple %98, 8 : i32
    %100 = arith.index_cast %99 : i32 to index
    %c0_29 = arith.constant 0 : index
    %101 = vector.load %arg11[%100, %c0_29] : memref<64x128xf32, #tpu.memory_space<vmem>>, vector<8x128xf32>
    %cst_30 = arith.constant dense<0.000000e+00> : vector<8x128xf32>
    %102 = tpu.matmul %97, %7, %cst_30 {dimension_numbers = #tpu.dot_dimension_numbers<[1], [0], [0], [1], [0, 0, 1, 1], [], []>} : vector<8x32xf32>, vector<32x128xf32>, vector<8x128xf32> -> vector<8x128xf32>
    %103 = arith.addf %101, %102 : vector<8x128xf32>
    %104 = vector.extract_strided_slice %103 {offsets = [0, 0], sizes = [8, 96], strides = [1, 1]} : vector<8x128xf32> to vector<8x96xf32>
    %105 = arith.negf %104 : vector<8x96xf32>
    %106 = math.exp %105 : vector<8x96xf32>
    %cst_31 = arith.constant 1.000000e+00 : f32
    %107 = vector.broadcast %cst_31 : f32 to vector<8x96xf32>
    %108 = arith.addf %107, %106 : vector<8x96xf32>
    %109 = arith.divf %107, %108 : vector<8x96xf32>
    %110 = vector.extract_strided_slice %103 {offsets = [0, 96], sizes = [8, 32], strides = [1, 1]} : vector<8x128xf32> to vector<8x32xf32>
    %111 = math.tanh %110 : vector<8x32xf32>
    %112 = vector.extract_strided_slice %109 {offsets = [0, 0], sizes = [8, 32], strides = [1, 1]} : vector<8x96xf32> to vector<8x32xf32>
    %113 = vector.extract_strided_slice %109 {offsets = [0, 32], sizes = [8, 32], strides = [1, 1]} : vector<8x96xf32> to vector<8x32xf32>
    %114 = vector.extract_strided_slice %109 {offsets = [0, 64], sizes = [8, 32], strides = [1, 1]} : vector<8x96xf32> to vector<8x32xf32>
    %115 = arith.mulf %113, %95 : vector<8x32xf32>
    %116 = arith.mulf %112, %111 : vector<8x32xf32>
    %117 = arith.addf %115, %116 : vector<8x32xf32>
    %118 = math.tanh %117 : vector<8x32xf32>
    %119 = arith.mulf %114, %118 : vector<8x32xf32>
    %c5_i32 = arith.constant 5 : i32
    %c8_i32_32 = arith.constant 8 : i32
    %120 = arith.muli %c5_i32, %c8_i32_32 : i32
    %121 = tpu.assume_multiple %120, 8 : i32
    %122 = arith.index_cast %121 : i32 to index
    %c0_33 = arith.constant 0 : index
    %123 = vector.load %arg11[%122, %c0_33] : memref<64x128xf32, #tpu.memory_space<vmem>>, vector<8x128xf32>
    %cst_34 = arith.constant dense<0.000000e+00> : vector<8x128xf32>
    %124 = tpu.matmul %119, %7, %cst_34 {dimension_numbers = #tpu.dot_dimension_numbers<[1], [0], [0], [1], [0, 0, 1, 1], [], []>} : vector<8x32xf32>, vector<32x128xf32>, vector<8x128xf32> -> vector<8x128xf32>
    %125 = arith.addf %123, %124 : vector<8x128xf32>
    %126 = vector.extract_strided_slice %125 {offsets = [0, 0], sizes = [8, 96], strides = [1, 1]} : vector<8x128xf32> to vector<8x96xf32>
    %127 = arith.negf %126 : vector<8x96xf32>
    %128 = math.exp %127 : vector<8x96xf32>
    %cst_35 = arith.constant 1.000000e+00 : f32
    %129 = vector.broadcast %cst_35 : f32 to vector<8x96xf32>
    %130 = arith.addf %129, %128 : vector<8x96xf32>
    %131 = arith.divf %129, %130 : vector<8x96xf32>
    %132 = vector.extract_strided_slice %125 {offsets = [0, 96], sizes = [8, 32], strides = [1, 1]} : vector<8x128xf32> to vector<8x32xf32>
    %133 = math.tanh %132 : vector<8x32xf32>
    %134 = vector.extract_strided_slice %131 {offsets = [0, 0], sizes = [8, 32], strides = [1, 1]} : vector<8x96xf32> to vector<8x32xf32>
    %135 = vector.extract_strided_slice %131 {offsets = [0, 32], sizes = [8, 32], strides = [1, 1]} : vector<8x96xf32> to vector<8x32xf32>
    %136 = vector.extract_strided_slice %131 {offsets = [0, 64], sizes = [8, 32], strides = [1, 1]} : vector<8x96xf32> to vector<8x32xf32>
    %137 = arith.mulf %135, %117 : vector<8x32xf32>
    %138 = arith.mulf %134, %133 : vector<8x32xf32>
    %139 = arith.addf %137, %138 : vector<8x32xf32>
    %140 = math.tanh %139 : vector<8x32xf32>
    %141 = arith.mulf %136, %140 : vector<8x32xf32>
    %c6_i32 = arith.constant 6 : i32
    %c8_i32_36 = arith.constant 8 : i32
    %142 = arith.muli %c6_i32, %c8_i32_36 : i32
    %143 = tpu.assume_multiple %142, 8 : i32
    %144 = arith.index_cast %143 : i32 to index
    %c0_37 = arith.constant 0 : index
    %145 = vector.load %arg11[%144, %c0_37] : memref<64x128xf32, #tpu.memory_space<vmem>>, vector<8x128xf32>
    %cst_38 = arith.constant dense<0.000000e+00> : vector<8x128xf32>
    %146 = tpu.matmul %141, %7, %cst_38 {dimension_numbers = #tpu.dot_dimension_numbers<[1], [0], [0], [1], [0, 0, 1, 1], [], []>} : vector<8x32xf32>, vector<32x128xf32>, vector<8x128xf32> -> vector<8x128xf32>
    %147 = arith.addf %145, %146 : vector<8x128xf32>
    %148 = vector.extract_strided_slice %147 {offsets = [0, 0], sizes = [8, 96], strides = [1, 1]} : vector<8x128xf32> to vector<8x96xf32>
    %149 = arith.negf %148 : vector<8x96xf32>
    %150 = math.exp %149 : vector<8x96xf32>
    %cst_39 = arith.constant 1.000000e+00 : f32
    %151 = vector.broadcast %cst_39 : f32 to vector<8x96xf32>
    %152 = arith.addf %151, %150 : vector<8x96xf32>
    %153 = arith.divf %151, %152 : vector<8x96xf32>
    %154 = vector.extract_strided_slice %147 {offsets = [0, 96], sizes = [8, 32], strides = [1, 1]} : vector<8x128xf32> to vector<8x32xf32>
    %155 = math.tanh %154 : vector<8x32xf32>
    %156 = vector.extract_strided_slice %153 {offsets = [0, 0], sizes = [8, 32], strides = [1, 1]} : vector<8x96xf32> to vector<8x32xf32>
    %157 = vector.extract_strided_slice %153 {offsets = [0, 32], sizes = [8, 32], strides = [1, 1]} : vector<8x96xf32> to vector<8x32xf32>
    %158 = vector.extract_strided_slice %153 {offsets = [0, 64], sizes = [8, 32], strides = [1, 1]} : vector<8x96xf32> to vector<8x32xf32>
    %159 = arith.mulf %157, %139 : vector<8x32xf32>
    %160 = arith.mulf %156, %155 : vector<8x32xf32>
    %161 = arith.addf %159, %160 : vector<8x32xf32>
    %162 = math.tanh %161 : vector<8x32xf32>
    %163 = arith.mulf %158, %162 : vector<8x32xf32>
    %c7_i32 = arith.constant 7 : i32
    %c8_i32_40 = arith.constant 8 : i32
    %164 = arith.muli %c7_i32, %c8_i32_40 : i32
    %165 = tpu.assume_multiple %164, 8 : i32
    %166 = arith.index_cast %165 : i32 to index
    %c0_41 = arith.constant 0 : index
    %167 = vector.load %arg11[%166, %c0_41] : memref<64x128xf32, #tpu.memory_space<vmem>>, vector<8x128xf32>
    %cst_42 = arith.constant dense<0.000000e+00> : vector<8x128xf32>
    %168 = tpu.matmul %163, %7, %cst_42 {dimension_numbers = #tpu.dot_dimension_numbers<[1], [0], [0], [1], [0, 0, 1, 1], [], []>} : vector<8x32xf32>, vector<32x128xf32>, vector<8x128xf32> -> vector<8x128xf32>
    %169 = arith.addf %167, %168 : vector<8x128xf32>
    %170 = vector.extract_strided_slice %169 {offsets = [0, 0], sizes = [8, 96], strides = [1, 1]} : vector<8x128xf32> to vector<8x96xf32>
    %171 = arith.negf %170 : vector<8x96xf32>
    %172 = math.exp %171 : vector<8x96xf32>
    %cst_43 = arith.constant 1.000000e+00 : f32
    %173 = vector.broadcast %cst_43 : f32 to vector<8x96xf32>
    %174 = arith.addf %173, %172 : vector<8x96xf32>
    %175 = arith.divf %173, %174 : vector<8x96xf32>
    %176 = vector.extract_strided_slice %169 {offsets = [0, 96], sizes = [8, 32], strides = [1, 1]} : vector<8x128xf32> to vector<8x32xf32>
    %177 = math.tanh %176 : vector<8x32xf32>
    %178 = vector.extract_strided_slice %175 {offsets = [0, 0], sizes = [8, 32], strides = [1, 1]} : vector<8x96xf32> to vector<8x32xf32>
    %179 = vector.extract_strided_slice %175 {offsets = [0, 32], sizes = [8, 32], strides = [1, 1]} : vector<8x96xf32> to vector<8x32xf32>
    %180 = vector.extract_strided_slice %175 {offsets = [0, 64], sizes = [8, 32], strides = [1, 1]} : vector<8x96xf32> to vector<8x32xf32>
    %181 = arith.mulf %179, %161 : vector<8x32xf32>
    %182 = arith.mulf %178, %177 : vector<8x32xf32>
    %183 = arith.addf %181, %182 : vector<8x32xf32>
    %184 = math.tanh %183 : vector<8x32xf32>
    %185 = arith.mulf %180, %184 : vector<8x32xf32>
    %c8_i32_44 = arith.constant 8 : i32
    %c0_45 = arith.constant 0 : index
    %c0_46 = arith.constant 0 : index
    %186 = vector.load %arg9[%c0_45, %c0_46] : memref<8x32xf32, #tpu.memory_space<vmem>>, vector<8x32xf32>
    tpu.vector_store %arg9[%c0_45, %c0_46], %185 {strides = array<i32>} : memref<8x32xf32, #tpu.memory_space<vmem>>, vector<8x32xf32>,
    %c0_47 = arith.constant 0 : index
    %c0_48 = arith.constant 0 : index
    %187 = vector.load %arg10[%c0_47, %c0_48] : memref<8x32xf32, #tpu.memory_space<vmem>>, vector<8x32xf32>
    tpu.vector_store %arg10[%c0_47, %c0_48], %183 {strides = array<i32>} : memref<8x32xf32, #tpu.memory_space<vmem>>, vector<8x32xf32>,
    %c0_49 = arith.constant 0 : index
    %c0_50 = arith.constant 0 : index
    %188 = vector.load %arg4[%c0_49, %c0_50] : memref<32x10xf32, #tpu.memory_space<vmem>>, vector<32x10xf32>
    %cst_51 = arith.constant dense<0.000000e+00> : vector<8x10xf32>
    %189 = tpu.matmul %185, %188, %cst_51 {dimension_numbers = #tpu.dot_dimension_numbers<[1], [0], [0], [1], [0, 0, 1, 1], [], []>} : vector<8x32xf32>, vector<32x10xf32>, vector<8x10xf32> -> vector<8x10xf32>
    %c0_52 = arith.constant 0 : index
    %c0_53 = arith.constant 0 : index
    %190 = vector.load %arg5[%c0_52, %c0_53] : memref<1x10xf32, #tpu.memory_space<vmem>>, vector<1x10xf32>
    %191 = vector.broadcast %190 : vector<1x10xf32> to vector<8x10xf32>
    %192 = arith.addf %189, %191 : vector<8x10xf32>
    %cst_54 = arith.constant dense<0xFF800000> : vector<8xf32>
    %193 = vector.multi_reduction <maximumf>, %192, %cst_54 [1] : vector<8x10xf32> to vector<8xf32>
    %194 = vector.shape_cast %193 : vector<8xf32> to vector<8x1xf32>
    %195 = vector.broadcast %194 : vector<8x1xf32> to vector<8x10xf32>
    %196 = arith.subf %192, %195 : vector<8x10xf32>
    %197 = math.exp %196 : vector<8x10xf32>
    %cst_55 = arith.constant dense<0.000000e+00> : vector<8xf32>
    %198 = vector.multi_reduction <add>, %197, %cst_55 [1] : vector<8x10xf32> to vector<8xf32>
    %199 = vector.shape_cast %198 : vector<8xf32> to vector<8x1xf32>
    %200 = math.log %199 : vector<8x1xf32>
    %201 = vector.broadcast %200 : vector<8x1xf32> to vector<8x10xf32>
    %202 = arith.subf %196, %201 : vector<8x10xf32>
    %c0_56 = arith.constant 0 : index
    %c0_57 = arith.constant 0 : index
    %203 = vector.load %arg8[%c0_56, %c0_57] : memref<8x10xf32, #tpu.memory_space<vmem>>, vector<8x10xf32>
    tpu.vector_store %arg8[%c0_56, %c0_57], %202 {strides = array<i32>} : memref<8x10xf32, #tpu.memory_space<vmem>>, vector<8x10xf32>,
    return
  }
}

</mosaic_0001>

<llo_original>
// kernel: tpu_custom_call.1
$region0: #{tpu_custom_call.1}
  #allocation0 [shape = 'u32[]', space=smem, size = 0x4, offset = 0x4, fixed_abs, tag = 'smem constant byte address 0x4 - core index']
  #allocation1 [shape = 'u32[144,128]{1,0:T(1,128)}', space=vmem, size = 0x12000, scoped, tag = 'internal scratch']
  #allocation2 [shape = 'f32[64,128]{1,0:T(8,128)}', space=vmem, size = 0x8000, scoped, tag = 'scratch operand']
  %s0 = inlined_call_operand.vmem [shape: f32[64,16], index: 0, kind: input, shape index: {}]
  %s1 = inlined_call_operand.vmem [shape: f32[16,128], index: 1, kind: input, shape index: {}]
  %s2 = inlined_call_operand.vmem [shape: f32[32,128], index: 2, kind: input, shape index: {}]
  %s3 = inlined_call_operand.vmem [shape: f32[1,128], index: 3, kind: input, shape index: {}]
  %s4 = inlined_call_operand.vmem [shape: f32[32,10], index: 4, kind: input, shape index: {}]
  %s5 = inlined_call_operand.vmem [shape: f32[1,10], index: 5, kind: input, shape index: {}]
  %s6 = inlined_call_operand.vmem [shape: f32[8,32], index: 6, kind: input, shape index: {}]
  %s7 = inlined_call_operand.vmem [shape: f32[8,32], index: 7, kind: input, shape index: {}]
  %s8 = inlined_call_operand.hbm [shape: f32[8,10], index: 8, kind: output, shape index: {0}]
  %s9 = inlined_call_operand.hbm [shape: f32[8,32], index: 9, kind: output, shape index: {1}]
  %s10 = inlined_call_operand.hbm [shape: f32[8,32], index: 10, kind: output, shape index: {2}]
  %11 = xla_tuple %s8, %s9, %s10
  %s12 = sld [smem:[#allocation0]]
  $region58: #{tpu_custom_call.1} parent=0
    _
  %s14 = ssub.s32 1, %s12
  %s15 = scalar_select 0, %s14, %s12
  $region1: #{tpu_custom_call.1} parent=0
    #allocation3 [shape = 'u8[4096]{0}', space=vmem, size = 0x1000, scoped, tag = 'output window, operand 0, single buffered']
    #allocation4 [shape = 's32[1]{0}', space=sflag, size = 0x4, scoped, tag = 'scoped memory for tpu_custom_call.1']
    #allocation5 [shape = 'u8[4096]{0}', space=vmem, size = 0x1000, scoped, tag = 'output window, operand 1, single buffered']
    #allocation6 [shape = 's32[1]{0}', space=sflag, size = 0x4, scoped, tag = 'scoped memory for tpu_custom_call.1']
    #allocation7 [shape = 'u8[4096]{0}', space=vmem, size = 0x1000, scoped, tag = 'output window, operand 2, single buffered']
    %16 = vsyncpa [#allocation4], 0
    %17 = vsyncpa [#allocation6], 0
    // Predicated region
    $region2: #{tpu_custom_call.1} parent=1 // pred_check
      _
    $region3: #{tpu_custom_call.1} parent=1 // pred_check_branch
      %19 = sbr.rel (0) target = $region5
    $region4: #{tpu_custom_call.1} parent=1 // pred_region
      _
    $region5: #{tpu_custom_call.1} parent=1 // pred_fallthru
      _
    // Predicated region
    $region6: #{tpu_custom_call.1} parent=1 // pred_check
      _
    $region7: #{tpu_custom_call.1} parent=1 // pred_check_branch
      %21 = sbr.rel (0) target = $region9
    $region8: #{tpu_custom_call.1} parent=1 // pred_region
      _
    $region9: #{tpu_custom_call.1} parent=1 // pred_fallthru
      _
    // Predicated region
    $region10: #{tpu_custom_call.1} parent=1 // pred_check
      _
    $region11: #{tpu_custom_call.1} parent=1 // pred_check_branch
      %23 = sbr.rel (0) target = $region13
    $region12: #{tpu_custom_call.1} parent=1 // pred_region
      _
    $region13: #{tpu_custom_call.1} parent=1 // pred_fallthru
      _
    // Predicated region
    $region14: #{tpu_custom_call.1} parent=1 // pred_check
      _
    $region15: #{tpu_custom_call.1} parent=1 // pred_check_branch
      %25 = sbr.rel (0) target = $region17
    $region16: #{tpu_custom_call.1} parent=1 // pred_region
      _
    $region17: #{tpu_custom_call.1} parent=1 // pred_fallthru
      _
    // Predicated region
    $region18: #{tpu_custom_call.1} parent=1 // pred_check
      _
    $region19: #{tpu_custom_call.1} parent=1 // pred_check_branch
      %27 = sbr.rel (0) target = $region21
    $region20: #{tpu_custom_call.1} parent=1 // pred_region
      _
    $region21: #{tpu_custom_call.1} parent=1 // pred_fallthru
      _
    // Predicated region
    $region22: #{tpu_custom_call.1} parent=1 // pred_check
      _
    $region23: #{tpu_custom_call.1} parent=1 // pred_check_branch
      %29 = sbr.rel (0) target = $region25
    $region24: #{tpu_custom_call.1} parent=1 // pred_region
      _
    $region25: #{tpu_custom_call.1} parent=1 // pred_fallthru
      _
    // Predicated region
    $region26: #{tpu_custom_call.1} parent=1 // pred_check
      _
    $region27: #{tpu_custom_call.1} parent=1 // pred_check_branch
      %31 = sbr.rel (0) target = $region29
    $region28: #{tpu_custom_call.1} parent=1 // pred_region
      _
    $region29: #{tpu_custom_call.1} parent=1 // pred_fallthru
      _
    // Predicated region
    $region30: #{tpu_custom_call.1} parent=1 // pred_check
      _
    $region31: #{tpu_custom_call.1} parent=1 // pred_check_branch
      %33 = sbr.rel (0) target = $region33
    $region32: #{tpu_custom_call.1} parent=1 // pred_region
      _
    $region33: #{tpu_custom_call.1} parent=1 // pred_fallthru
      _
    %v34 = vld [vmem:[%s0] sm:$0xff]
    %v35 = vld [vmem:[%s0 + $0x8] sm:$0xff]
    %v36 = vld [vmem:[%s0 + $0x10] sm:$0xff]
    %v37 = vld [vmem:[%s0 + $0x18] sm:$0xff]
    %v38 = vld [vmem:[%s0 + $0x20] sm:$0xff]
    %v39 = vld [vmem:[%s0 + $0x28] sm:$0xff]
    %v40 = vld [vmem:[%s0 + $0x30] sm:$0xff]
    %v41 = vld [vmem:[%s0 + $0x38] sm:$0xff]
    %v42 = vld [vmem:[%s1] sm:$0xff]
    %v43 = vld [vmem:[%s1 + $0x8] sm:$0xff]
    %v44 = vld [vmem:[%s3] sm:$0x1]
    %v46 = vlaneseq
    %v47 = vshrl.u32 %v46, 7
    %v48 = vsub.s32 0, %v47
    %v49 = vrot.slane %v44, %v48
    %vm51 = vcmask 130048
    %v53 = vsel %vm51, %v34, 0
    %v56 = vsel %vm51, %v35, 0
    %v59 = vsel %vm51, %v36, 0
    %v62 = vsel %vm51, %v37, 0
    %v65 = vsel %vm51, %v38, 0
    %v68 = vsel %vm51, %v39, 0
    %v71 = vsel %vm51, %v40, 0
    %v74 = vsel %vm51, %v41, 0
    %76 = vmatprep.subr.mxu0 0.0
    %77 = vmatpush1.msra.mxu0 0.0
    %78 = vmatprep.subr.mxu0 0.0
    %79 = vmatpush1.msra.mxu0 0.0
    %80 = vmatprep.subr.mxu0 0.0
    %81 = vmatpush1.msra.mxu0 0.0
    %82 = vmatprep.subr.mxu0 0.0
    %83 = vmatpush1.msra.mxu0 0.0
    %84 = vmatprep.subr.mxu0 0.0
    %85 = vmatpush1.msra.mxu0 0.0
    %86 = vmatprep.subr.mxu0 0.0
    %87 = vmatpush1.msra.mxu0 0.0
    %88 = vmatprep.subr.mxu0 0.0
    %89 = vmatpush1.msra.mxu0 0.0
    %90 = vmatprep.subr.mxu0 0.0
    %91 = vmatpush1.msra.mxu0 0.0
    %92 = vmatprep.subr.mxu0 0.0
    %93 = vmatpush1.msra.mxu0 0.0
    %94 = vmatprep.subr.mxu0 0.0
    %95 = vmatpush1.msra.mxu0 0.0
    %96 = vmatprep.subr.mxu0 0.0
    %97 = vmatpush1.msra.mxu0 0.0
    %98 = vmatprep.subr.mxu0 0.0
    %99 = vmatpush1.msra.mxu0 0.0
    %100 = vmatprep.subr.mxu0 0.0
    %101 = vmatpush1.msra.mxu0 0.0
    %102 = vmatprep.subr.mxu0 0.0
    %103 = vmatpush1.msra.mxu0 0.0
    %104 = vmatprep.subr.mxu0 0.0
    %105 = vmatpush1.msra.mxu0 %v43
    %106 = vmatprep.subr.mxu0 0.0
    %107 = vmatpush1.msra.mxu0 %v42
    %108 = vmatprep.subr.mxu0 0.0
    %109 = vmatpush2.msra.mxu0 0.0
    %110 = vmatprep.subr.mxu0 0.0
    %111 = vmatpush2.msra.mxu0 0.0
    %112 = vmatprep.subr.mxu0 0.0
    %113 = vmatpush2.msra.mxu0 0.0
    %114 = vmatprep.subr.mxu0 0.0
    %115 = vmatpush2.msra.mxu0 0.0
    %116 = vmatprep.subr.mxu0 0.0
    %117 = vmatpush2.msra.mxu0 0.0
    %118 = vmatprep.subr.mxu0 0.0
    %119 = vmatpush2.msra.mxu0 0.0
    %120 = vmatprep.subr.mxu0 0.0
    %121 = vmatpush2.msra.mxu0 0.0
    %122 = vmatprep.subr.mxu0 0.0
    %123 = vmatpush2.msra.mxu0 0.0
    %124 = vmatprep.subr.mxu0 0.0
    %125 = vmatpush2.msra.mxu0 0.0
    %126 = vmatprep.subr.mxu0 0.0
    %127 = vmatpush2.msra.mxu0 0.0
    %128 = vmatprep.subr.mxu0 0.0
    %129 = vmatpush2.msra.mxu0 0.0
    %130 = vmatprep.subr.mxu0 0.0
    %131 = vmatpush2.msra.mxu0 0.0
    %132 = vmatprep.subr.mxu0 0.0
    %133 = vmatpush2.msra.mxu0 0.0
    %134 = vmatprep.subr.mxu0 0.0
    %135 = vmatpush2.msra.mxu0 0.0
    %136 = vmatprep.subr.mxu0 0.0
    %137 = vmatpush2.msra.mxu0 0.0
    %138 = vmatprep.subr.mxu0 0.0
    %139 = vmatpush2.msra.mxu0 0.0
    %140 = vmatprep.mubr.f32.mxu0 0.0
    %141 = vmatmul.mubr.f32.gmra.mxu0 %v53
    %v142 = vpop.f32.mrf.mxu0
    %v143 = vadd.f32 %v49, %v142
    %v144 = vpop.f32.mrf.mxu0
    %145 = vmatprep.mubr.f32.mxu0 0.0
    %146 = vmatmul.mubr.f32.gmra.mxu0 %v56
    %v147 = vpop.f32.mrf.mxu0
    %v148 = vadd.f32 %v49, %v147
    %v149 = vpop.f32.mrf.mxu0
    %150 = vmatprep.mubr.f32.mxu0 0.0
    %151 = vmatmul.mubr.f32.gmra.mxu0 %v59
    %v152 = vpop.f32.mrf.mxu0
    %v153 = vadd.f32 %v49, %v152
    %v154 = vpop.f32.mrf.mxu0
    %155 = vmatprep.mubr.f32.mxu0 0.0
    %156 = vmatmul.mubr.f32.gmra.mxu0 %v62
    %v157 = vpop.f32.mrf.mxu0
    %v158 = vadd.f32 %v49, %v157
    %v159 = vpop.f32.mrf.mxu0
    %160 = vmatprep.mubr.f32.mxu0 0.0
    %161 = vmatmul.mubr.f32.gmra.mxu0 %v65
    %v162 = vpop.f32.mrf.mxu0
    %v163 = vadd.f32 %v49, %v162
    %v164 = vpop.f32.mrf.mxu0
    %165 = vmatprep.mubr.f32.mxu0 0.0
    %166 = vmatmul.mubr.f32.gmra.mxu0 %v68
    %v167 = vpop.f32.mrf.mxu0
    %v168 = vadd.f32 %v49, %v167
    %v169 = vpop.f32.mrf.mxu0
    %170 = vmatprep.mubr.f32.mxu0 0.0
    %171 = vmatmul.mubr.f32.gmra.mxu0 %v71
    %v172 = vpop.f32.mrf.mxu0
    %v173 = vadd.f32 %v49, %v172
    %v174 = vpop.f32.mrf.mxu0
    %175 = vmatprep.mubr.f32.mxu0 0.0
    %176 = vmatmul.mubr.f32.gmra.mxu0 %v74
    %v177 = vpop.f32.mrf.mxu0
    %v178 = vadd.f32 %v49, %v177
    %v179 = vpop.f32.mrf.mxu0
    %180 = vdwg.mxu0
    %181 = vst [vmem:[#allocation2] sm:$0xff] %v143
    %182 = vst [vmem:[#allocation2 + $0x8] sm:$0xff] %v148
    %183 = vst [vmem:[#allocation2 + $0x10] sm:$0xff] %v153
    %184 = vst [vmem:[#allocation2 + $0x18] sm:$0xff] %v158
    %185 = vst [vmem:[#allocation2 + $0x20] sm:$0xff] %v163
    %186 = vst [vmem:[#allocation2 + $0x28] sm:$0xff] %v168
    %187 = vst [vmem:[#allocation2 + $0x30] sm:$0xff] %v173
    %188 = vst [vmem:[#allocation2 + $0x38] sm:$0xff] %v178
    %v189 = vld [vmem:[%s2] sm:$0xff]
    %v190 = vld [vmem:[%s2 + $0x8] sm:$0xff]
    %v191 = vld [vmem:[%s2 + $0x10] sm:$0xff]
    %v192 = vld [vmem:[%s2 + $0x18] sm:$0xff]
    %v193 = vld [vmem:[%s6] sm:$0xff]
    %v194 = vld [vmem:[%s7] sm:$0xff]
    %v195 = vld [vmem:[#allocation2] sm:$0xff]
    %vm196 = vcmask 261120
    %v198 = vsel %vm196, %v193, 0
    %200 = vmatprep.subr.mxu0 0.0
    %201 = vmatpush1.msra.mxu0 0.0
    %202 = vmatprep.subr.mxu0 0.0
    %203 = vmatpush1.msra.mxu0 0.0
    %204 = vmatprep.subr.mxu0 0.0
    %205 = vmatpush1.msra.mxu0 0.0
    %206 = vmatprep.subr.mxu0 0.0
    %207 = vmatpush1.msra.mxu0 0.0
    %208 = vmatprep.subr.mxu0 0.0
    %209 = vmatpush1.msra.mxu0 0.0
    %210 = vmatprep.subr.mxu0 0.0
    %211 = vmatpush1.msra.mxu0 0.0
    %212 = vmatprep.subr.mxu0 0.0
    %213 = vmatpush1.msra.mxu0 0.0
    %214 = vmatprep.subr.mxu0 0.0
    %215 = vmatpush1.msra.mxu0 0.0
    %216 = vmatprep.subr.mxu0 0.0
    %217 = vmatpush1.msra.mxu0 0.0
    %218 = vmatprep.subr.mxu0 0.0
    %219 = vmatpush1.msra.mxu0 0.0
    %220 = vmatprep.subr.mxu0 0.0
    %221 = vmatpush1.msra.mxu0 0.0
    %222 = vmatprep.subr.mxu0 0.0
    %223 = vmatpush1.msra.mxu0 0.0
    %224 = vmatprep.subr.mxu0 0.0
    %225 = vmatpush1.msra.mxu0 %v192
    %226 = vmatprep.subr.mxu0 0.0
    %227 = vmatpush1.msra.mxu0 %v191
    %228 = vmatprep.subr.mxu0 0.0
    %229 = vmatpush1.msra.mxu0 %v190
    %230 = vmatprep.subr.mxu0 0.0
    %231 = vmatpush1.msra.mxu0 %v189
    %232 = vmatprep.subr.mxu0 0.0
    %233 = vmatpush2.msra.mxu0 0.0
    %234 = vmatprep.subr.mxu0 0.0
    %235 = vmatpush2.msra.mxu0 0.0
    %236 = vmatprep.subr.mxu0 0.0
    %237 = vmatpush2.msra.mxu0 0.0
    %238 = vmatprep.subr.mxu0 0.0
    %239 = vmatpush2.msra.mxu0 0.0
    %240 = vmatprep.subr.mxu0 0.0
    %241 = vmatpush2.msra.mxu0 0.0
    %242 = vmatprep.subr.mxu0 0.0
    %243 = vmatpush2.msra.mxu0 0.0
    %244 = vmatprep.subr.mxu0 0.0
    %245 = vmatpush2.msra.mxu0 0.0
    %246 = vmatprep.subr.mxu0 0.0
    %247 = vmatpush2.msra.mxu0 0.0
    %248 = vmatprep.subr.mxu0 0.0
    %249 = vmatpush2.msra.mxu0 0.0
    %250 = vmatprep.subr.mxu0 0.0
    %251 = vmatpush2.msra.mxu0 0.0
    %252 = vmatprep.subr.mxu0 0.0
    %253 = vmatpush2.msra.mxu0 0.0
    %254 = vmatprep.subr.mxu0 0.0
    %255 = vmatpush2.msra.mxu0 0.0
    %256 = vmatprep.subr.mxu0 0.0
    %257 = vmatpush2.msra.mxu0 0.0
    %258 = vmatprep.subr.mxu0 0.0
    %259 = vmatpush2.msra.mxu0 0.0
    %260 = vmatprep.subr.mxu0 0.0
    %261 = vmatpush2.msra.mxu0 0.0
    %262 = vmatprep.subr.mxu0 0.0
    %263 = vmatpush2.msra.mxu0 0.0
    %264 = vmatprep.mubr.f32.mxu0 0.0
    %265 = vmatmul.mubr.f32.gmra.mxu0 %v198
    %v266 = vpop.f32.mrf.mxu0
    %v267 = vadd.f32 0.0, %v266
    %v268 = vpop.f32.mrf.mxu0
    %269 = vdwg.mxu0
    %v270 = vadd.f32 %v195, %v267
    %v271 = vxor.u32 %v270, 2147483648
    %v272 = vmul.f32 %v271, 1.442695
    %v273 = vpow.pop %v272
    %v274 = vadd.f32 %v273, 1.0
    %v275 = vrcp.pop %v274
    %v276 = vmul.f32 1.0, %v275
    %v277 = vtanh.pop %v270
    %279 = vrot.lane.b32.xlu0 %v194, 32
    %v280 = vpop.permute.xlu0 %279
    %v282 = vmul.f32 %v276, %v280
    %284 = vrot.lane.b32.xlu0 %v277, 32
    %v285 = vpop.permute.xlu0 %284
    %v287 = vmul.f32 %v276, %v285
    %289 = vrot.lane.b32.xlu0 %v287, 32
    %v290 = vpop.permute.xlu0 %289
    %v292 = vadd.f32 %v282, %v290
    %v293 = vtanh.pop %v292
    %295 = vrot.lane.b32.xlu0 %v293, 32
    %v296 = vpop.permute.xlu0 %295
    %v298 = vmul.f32 %v276, %v296
    %s299 = scalar_lea.vmem [#allocation2], 8
    %v300 = vld [vmem:[%s299] sm:$0xff]
    %302 = vrot.lane.b32.xlu0 %v298, 64
    %v303 = vpop.permute.xlu0 %302
    %v304 = vsel %vm196, %v303, 0
    %306 = vmatprep.subr.mxu0 0.0
    %307 = vmatpush1.msra.mxu0 0.0
    %308 = vmatprep.subr.mxu0 0.0
    %309 = vmatpush1.msra.mxu0 0.0
    %310 = vmatprep.subr.mxu0 0.0
    %311 = vmatpush1.msra.mxu0 0.0
    %312 = vmatprep.subr.mxu0 0.0
    %313 = vmatpush1.msra.mxu0 0.0
    %314 = vmatprep.subr.mxu0 0.0
    %315 = vmatpush1.msra.mxu0 0.0
    %316 = vmatprep.subr.mxu0 0.0
    %317 = vmatpush1.msra.mxu0 0.0
    %318 = vmatprep.subr.mxu0 0.0
    %319 = vmatpush1.msra.mxu0 0.0
    %320 = vmatprep.subr.mxu0 0.0
    %321 = vmatpush1.msra.mxu0 0.0
    %322 = vmatprep.subr.mxu0 0.0
    %323 = vmatpush1.msra.mxu0 0.0
    %324 = vmatprep.subr.mxu0 0.0
    %325 = vmatpush1.msra.mxu0 0.0
    %326 = vmatprep.subr.mxu0 0.0
    %327 = vmatpush1.msra.mxu0 0.0
    %328 = vmatprep.subr.mxu0 0.0
    %329 = vmatpush1.msra.mxu0 0.0
    %330 = vmatprep.subr.mxu0 0.0
    %331 = vmatpush1.msra.mxu0 %v192
    %332 = vmatprep.subr.mxu0 0.0
    %333 = vmatpush1.msra.mxu0 %v191
    %334 = vmatprep.subr.mxu0 0.0
    %335 = vmatpush1.msra.mxu0 %v190
    %336 = vmatprep.subr.mxu0 0.0
    %337 = vmatpush1.msra.mxu0 %v189
    %338 = vmatprep.subr.mxu0 0.0
    %339 = vmatpush2.msra.mxu0 0.0
    %340 = vmatprep.subr.mxu0 0.0
    %341 = vmatpush2.msra.mxu0 0.0
    %342 = vmatprep.subr.mxu0 0.0
    %343 = vmatpush2.msra.mxu0 0.0
    %344 = vmatprep.subr.mxu0 0.0
    %345 = vmatpush2.msra.mxu0 0.0
    %346 = vmatprep.subr.mxu0 0.0
    %347 = vmatpush2.msra.mxu0 0.0
    %348 = vmatprep.subr.mxu0 0.0
    %349 = vmatpush2.msra.mxu0 0.0
    %350 = vmatprep.subr.mxu0 0.0
    %351 = vmatpush2.msra.mxu0 0.0
    %352 = vmatprep.subr.mxu0 0.0
    %353 = vmatpush2.msra.mxu0 0.0
    %354 = vmatprep.subr.mxu0 0.0
    %355 = vmatpush2.msra.mxu0 0.0
    %356 = vmatprep.subr.mxu0 0.0
    %357 = vmatpush2.msra.mxu0 0.0
    %358 = vmatprep.subr.mxu0 0.0
    %359 = vmatpush2.msra.mxu0 0.0
    %360 = vmatprep.subr.mxu0 0.0
    %361 = vmatpush2.msra.mxu0 0.0
    %362 = vmatprep.subr.mxu0 0.0
    %363 = vmatpush2.msra.mxu0 0.0
    %364 = vmatprep.subr.mxu0 0.0
    %365 = vmatpush2.msra.mxu0 0.0
    %366 = vmatprep.subr.mxu0 0.0
    %367 = vmatpush2.msra.mxu0 0.0
    %368 = vmatprep.subr.mxu0 0.0
    %369 = vmatpush2.msra.mxu0 0.0
    %370 = vmatprep.mubr.f32.mxu0 0.0
    %371 = vmatmul.mubr.f32.gmra.mxu0 %v304
    %v372 = vpop.f32.mrf.mxu0
    %v373 = vadd.f32 0.0, %v372
    %v374 = vpop.f32.mrf.mxu0
    %375 = vdwg.mxu0
    %v376 = vadd.f32 %v300, %v373
    %v377 = vxor.u32 %v376, 2147483648
    %v378 = vmul.f32 %v377, 1.442695
    %v379 = vpow.pop %v378
    %v380 = vadd.f32 %v379, 1.0
    %v381 = vrcp.pop %v380
    %v382 = vmul.f32 1.0, %v381
    %v383 = vtanh.pop %v376
    %v384 = vmul.f32 %v382, %v292
    %386 = vrot.lane.b32.xlu0 %v383, 32
    %v387 = vpop.permute.xlu0 %386
    %v389 = vmul.f32 %v382, %v387
    %391 = vrot.lane.b32.xlu0 %v389, 32
    %v392 = vpop.permute.xlu0 %391
    %v394 = vadd.f32 %v384, %v392
    %v395 = vtanh.pop %v394
    %397 = vrot.lane.b32.xlu0 %v395, 32
    %v398 = vpop.permute.xlu0 %397
    %v400 = vmul.f32 %v382, %v398
    %s401 = scalar_lea.vmem [#allocation2], 16
    %v402 = vld [vmem:[%s401] sm:$0xff]
    %404 = vrot.lane.b32.xlu0 %v400, 64
    %v405 = vpop.permute.xlu0 %404
    %v406 = vsel %vm196, %v405, 0
    %408 = vmatprep.subr.mxu0 0.0
    %409 = vmatpush1.msra.mxu0 0.0
    %410 = vmatprep.subr.mxu0 0.0
    %411 = vmatpush1.msra.mxu0 0.0
    %412 = vmatprep.subr.mxu0 0.0
    %413 = vmatpush1.msra.mxu0 0.0
    %414 = vmatprep.subr.mxu0 0.0
    %415 = vmatpush1.msra.mxu0 0.0
    %416 = vmatprep.subr.mxu0 0.0
    %417 = vmatpush1.msra.mxu0 0.0
    %418 = vmatprep.subr.mxu0 0.0
    %419 = vmatpush1.msra.mxu0 0.0
    %420 = vmatprep.subr.mxu0 0.0
    %421 = vmatpush1.msra.mxu0 0.0
    %422 = vmatprep.subr.mxu0 0.0
    %423 = vmatpush1.msra.mxu0 0.0
    %424 = vmatprep.subr.mxu0 0.0
    %425 = vmatpush1.msra.mxu0 0.0
    %426 = vmatprep.subr.mxu0 0.0
    %427 = vmatpush1.msra.mxu0 0.0
    %428 = vmatprep.subr.mxu0 0.0
    %429 = vmatpush1.msra.mxu0 0.0
    %430 = vmatprep.subr.mxu0 0.0
    %431 = vmatpush1.msra.mxu0 0.0
    %432 = vmatprep.subr.mxu0 0.0
    %433 = vmatpush1.msra.mxu0 %v192
    %434 = vmatprep.subr.mxu0 0.0
    %435 = vmatpush1.msra.mxu0 %v191
    %436 = vmatprep.subr.mxu0 0.0
    %437 = vmatpush1.msra.mxu0 %v190
    %438 = vmatprep.subr.mxu0 0.0
    %439 = vmatpush1.msra.mxu0 %v189
    %440 = vmatprep.subr.mxu0 0.0
    %441 = vmatpush2.msra.mxu0 0.0
    %442 = vmatprep.subr.mxu0 0.0
    %443 = vmatpush2.msra.mxu0 0.0
    %444 = vmatprep.subr.mxu0 0.0
    %445 = vmatpush2.msra.mxu0 0.0
    %446 = vmatprep.subr.mxu0 0.0
    %447 = vmatpush2.msra.mxu0 0.0
    %448 = vmatprep.subr.mxu0 0.0
    %449 = vmatpush2.msra.mxu0 0.0
    %450 = vmatprep.subr.mxu0 0.0
    %451 = vmatpush2.msra.mxu0 0.0
    %452 = vmatprep.subr.mxu0 0.0
    %453 = vmatpush2.msra.mxu0 0.0
    %454 = vmatprep.subr.mxu0 0.0
    %455 = vmatpush2.msra.mxu0 0.0
    %456 = vmatprep.subr.mxu0 0.0
    %457 = vmatpush2.msra.mxu0 0.0
    %458 = vmatprep.subr.mxu0 0.0
    %459 = vmatpush2.msra.mxu0 0.0
    %460 = vmatprep.subr.mxu0 0.0
    %461 = vmatpush2.msra.mxu0 0.0
    %462 = vmatprep.subr.mxu0 0.0
    %463 = vmatpush2.msra.mxu0 0.0
    %464 = vmatprep.subr.mxu0 0.0
    %465 = vmatpush2.msra.mxu0 0.0
    %466 = vmatprep.subr.mxu0 0.0
    %467 = vmatpush2.msra.mxu0 0.0
    %468 = vmatprep.subr.mxu0 0.0
    %469 = vmatpush2.msra.mxu0 0.0
    %470 = vmatprep.subr.mxu0 0.0
    %471 = vmatpush2.msra.mxu0 0.0
    %472 = vmatprep.mubr.f32.mxu0 0.0
    %473 = vmatmul.mubr.f32.gmra.mxu0 %v406
    %v474 = vpop.f32.mrf.mxu0
    %v475 = vadd.f32 0.0, %v474
    %v476 = vpop.f32.mrf.mxu0
    %477 = vdwg.mxu0
    %v478 = vadd.f32 %v402, %v475
    %v479 = vxor.u32 %v478, 2147483648
    %v480 = vmul.f32 %v479, 1.442695
    %v481 = vpow.pop %v480
    %v482 = vadd.f32 %v481, 1.0
    %v483 = vrcp.pop %v482
    %v484 = vmul.f32 1.0, %v483
    %v485 = vtanh.pop %v478
    %v486 = vmul.f32 %v484, %v394
    %488 = vrot.lane.b32.xlu0 %v485, 32
    %v489 = vpop.permute.xlu0 %488
    %v491 = vmul.f32 %v484, %v489
    %493 = vrot.lane.b32.xlu0 %v491, 32
    %v494 = vpop.permute.xlu0 %493
    %v496 = vadd.f32 %v486, %v494
    %v497 = vtanh.pop %v496
    %499 = vrot.lane.b32.xlu0 %v497, 32
    %v500 = vpop.permute.xlu0 %499
    %v502 = vmul.f32 %v484, %v500
    %s503 = scalar_lea.vmem [#allocation2], 24
    %v504 = vld [vmem:[%s503] sm:$0xff]
    %506 = vrot.lane.b32.xlu0 %v502, 64
    %v507 = vpop.permute.xlu0 %506
    %v508 = vsel %vm196, %v507, 0
    %510 = vmatprep.subr.mxu0 0.0
    %511 = vmatpush1.msra.mxu0 0.0
    %512 = vmatprep.subr.mxu0 0.0
    %513 = vmatpush1.msra.mxu0 0.0
    %514 = vmatprep.subr.mxu0 0.0
    %515 = vmatpush1.msra.mxu0 0.0
    %516 = vmatprep.subr.mxu0 0.0
    %517 = vmatpush1.msra.mxu0 0.0
    %518 = vmatprep.subr.mxu0 0.0
    %519 = vmatpush1.msra.mxu0 0.0
    %520 = vmatprep.subr.mxu0 0.0
    %521 = vmatpush1.msra.mxu0 0.0
    %522 = vmatprep.subr.mxu0 0.0
    %523 = vmatpush1.msra.mxu0 0.0
    %524 = vmatprep.subr.mxu0 0.0
    %525 = vmatpush1.msra.mxu0 0.0
    %526 = vmatprep.subr.mxu0 0.0
    %527 = vmatpush1.msra.mxu0 0.0
    %528 = vmatprep.subr.mxu0 0.0
    %529 = vmatpush1.msra.mxu0 0.0
    %530 = vmatprep.subr.mxu0 0.0
    %531 = vmatpush1.msra.mxu0 0.0
    %532 = vmatprep.subr.mxu0 0.0
    %533 = vmatpush1.msra.mxu0 0.0
    %534 = vmatprep.subr.mxu0 0.0
    %535 = vmatpush1.msra.mxu0 %v192
    %536 = vmatprep.subr.mxu0 0.0
    %537 = vmatpush1.msra.mxu0 %v191
    %538 = vmatprep.subr.mxu0 0.0
    %539 = vmatpush1.msra.mxu0 %v190
    %540 = vmatprep.subr.mxu0 0.0
    %541 = vmatpush1.msra.mxu0 %v189
    %542 = vmatprep.subr.mxu0 0.0
    %543 = vmatpush2.msra.mxu0 0.0
    %544 = vmatprep.subr.mxu0 0.0
    %545 = vmatpush2.msra.mxu0 0.0
    %546 = vmatprep.subr.mxu0 0.0
    %547 = vmatpush2.msra.mxu0 0.0
    %548 = vmatprep.subr.mxu0 0.0
    %549 = vmatpush2.msra.mxu0 0.0
    %550 = vmatprep.subr.mxu0 0.0
    %551 = vmatpush2.msra.mxu0 0.0
    %552 = vmatprep.subr.mxu0 0.0
    %553 = vmatpush2.msra.mxu0 0.0
    %554 = vmatprep.subr.mxu0 0.0
    %555 = vmatpush2.msra.mxu0 0.0
    %556 = vmatprep.subr.mxu0 0.0
    %557 = vmatpush2.msra.mxu0 0.0
    %558 = vmatprep.subr.mxu0 0.0
    %559 = vmatpush2.msra.mxu0 0.0
    %560 = vmatprep.subr.mxu0 0.0
    %561 = vmatpush2.msra.mxu0 0.0
    %562 = vmatprep.subr.mxu0 0.0
    %563 = vmatpush2.msra.mxu0 0.0
    %564 = vmatprep.subr.mxu0 0.0
    %565 = vmatpush2.msra.mxu0 0.0
    %566 = vmatprep.subr.mxu0 0.0
    %567 = vmatpush2.msra.mxu0 0.0
    %568 = vmatprep.subr.mxu0 0.0
    %569 = vmatpush2.msra.mxu0 0.0
    %570 = vmatprep.subr.mxu0 0.0
    %571 = vmatpush2.msra.mxu0 0.0
    %572 = vmatprep.subr.mxu0 0.0
    %573 = vmatpush2.msra.mxu0 0.0
    %574 = vmatprep.mubr.f32.mxu0 0.0
    %575 = vmatmul.mubr.f32.gmra.mxu0 %v508
    %v576 = vpop.f32.mrf.mxu0
    %v577 = vadd.f32 0.0, %v576
    %v578 = vpop.f32.mrf.mxu0
    %579 = vdwg.mxu0
    %v580 = vadd.f32 %v504, %v577
    %v581 = vxor.u32 %v580, 2147483648
    %v582 = vmul.f32 %v581, 1.442695
    %v583 = vpow.pop %v582
    %v584 = vadd.f32 %v583, 1.0
    %v585 = vrcp.pop %v584
    %v586 = vmul.f32 1.0, %v585
    %v587 = vtanh.pop %v580
    %v588 = vmul.f32 %v586, %v496
    %590 = vrot.lane.b32.xlu0 %v587, 32
    %v591 = vpop.permute.xlu0 %590
    %v593 = vmul.f32 %v586, %v591
    %595 = vrot.lane.b32.xlu0 %v593, 32
    %v596 = vpop.permute.xlu0 %595
    %v598 = vadd.f32 %v588, %v596
    %v599 = vtanh.pop %v598
    %601 = vrot.lane.b32.xlu0 %v599, 32
    %v602 = vpop.permute.xlu0 %601
    %v604 = vmul.f32 %v586, %v602
    %s605 = scalar_lea.vmem [#allocation2], 32
    %v606 = vld [vmem:[%s605] sm:$0xff]
    %608 = vrot.lane.b32.xlu0 %v604, 64
    %v609 = vpop.permute.xlu0 %608
    %v610 = vsel %vm196, %v609, 0
    %612 = vmatprep.subr.mxu0 0.0
    %613 = vmatpush1.msra.mxu0 0.0
    %614 = vmatprep.subr.mxu0 0.0
    %615 = vmatpush1.msra.mxu0 0.0
    %616 = vmatprep.subr.mxu0 0.0
    %617 = vmatpush1.msra.mxu0 0.0
    %618 = vmatprep.subr.mxu0 0.0
    %619 = vmatpush1.msra.mxu0 0.0
    %620 = vmatprep.subr.mxu0 0.0
    %621 = vmatpush1.msra.mxu0 0.0
    %622 = vmatprep.subr.mxu0 0.0
    %623 = vmatpush1.msra.mxu0 0.0
    %624 = vmatprep.subr.mxu0 0.0
    %625 = vmatpush1.msra.mxu0 0.0
    %626 = vmatprep.subr.mxu0 0.0
    %627 = vmatpush1.msra.mxu0 0.0
    %628 = vmatprep.subr.mxu0 0.0
    %629 = vmatpush1.msra.mxu0 0.0
    %630 = vmatprep.subr.mxu0 0.0
    %631 = vmatpush1.msra.mxu0 0.0
    %632 = vmatprep.subr.mxu0 0.0
    %633 = vmatpush1.msra.mxu0 0.0
    %634 = vmatprep.subr.mxu0 0.0
    %635 = vmatpush1.msra.mxu0 0.0
    %636 = vmatprep.subr.mxu0 0.0
    %637 = vmatpush1.msra.mxu0 %v192
    %638 = vmatprep.subr.mxu0 0.0
    %639 = vmatpush1.msra.mxu0 %v191
    %640 = vmatprep.subr.mxu0 0.0
    %641 = vmatpush1.msra.mxu0 %v190
    %642 = vmatprep.subr.mxu0 0.0
    %643 = vmatpush1.msra.mxu0 %v189
    %644 = vmatprep.subr.mxu0 0.0
    %645 = vmatpush2.msra.mxu0 0.0
    %646 = vmatprep.subr.mxu0 0.0
    %647 = vmatpush2.msra.mxu0 0.0
    %648 = vmatprep.subr.mxu0 0.0
    %649 = vmatpush2.msra.mxu0 0.0
    %650 = vmatprep.subr.mxu0 0.0
    %651 = vmatpush2.msra.mxu0 0.0
    %652 = vmatprep.subr.mxu0 0.0
    %653 = vmatpush2.msra.mxu0 0.0
    %654 = vmatprep.subr.mxu0 0.0
    %655 = vmatpush2.msra.mxu0 0.0
    %656 = vmatprep.subr.mxu0 0.0
    %657 = vmatpush2.msra.mxu0 0.0
    %658 = vmatprep.subr.mxu0 0.0
    %659 = vmatpush2.msra.mxu0 0.0
    %660 = vmatprep.subr.mxu0 0.0
    %661 = vmatpush2.msra.mxu0 0.0
    %662 = vmatprep.subr.mxu0 0.0
    %663 = vmatpush2.msra.mxu0 0.0
    %664 = vmatprep.subr.mxu0 0.0
    %665 = vmatpush2.msra.mxu0 0.0
    %666 = vmatprep.subr.mxu0 0.0
    %667 = vmatpush2.msra.mxu0 0.0
    %668 = vmatprep.subr.mxu0 0.0
    %669 = vmatpush2.msra.mxu0 0.0
    %670 = vmatprep.subr.mxu0 0.0
    %671 = vmatpush2.msra.mxu0 0.0
    %672 = vmatprep.subr.mxu0 0.0
    %673 = vmatpush2.msra.mxu0 0.0
    %674 = vmatprep.subr.mxu0 0.0
    %675 = vmatpush2.msra.mxu0 0.0
    %676 = vmatprep.mubr.f32.mxu0 0.0
    %677 = vmatmul.mubr.f32.gmra.mxu0 %v610
    %v678 = vpop.f32.mrf.mxu0
    %v679 = vadd.f32 0.0, %v678
    %v680 = vpop.f32.mrf.mxu0
    %681 = vdwg.mxu0
    %v682 = vadd.f32 %v606, %v679
    %v683 = vxor.u32 %v682, 2147483648
    %v684 = vmul.f32 %v683, 1.442695
    %v685 = vpow.pop %v684
    %v686 = vadd.f32 %v685, 1.0
    %v687 = vrcp.pop %v686
    %v688 = vmul.f32 1.0, %v687
    %v689 = vtanh.pop %v682
    %v690 = vmul.f32 %v688, %v598
    %692 = vrot.lane.b32.xlu0 %v689, 32
    %v693 = vpop.permute.xlu0 %692
    %v695 = vmul.f32 %v688, %v693
    %697 = vrot.lane.b32.xlu0 %v695, 32
    %v698 = vpop.permute.xlu0 %697
    %v700 = vadd.f32 %v690, %v698
    %v701 = vtanh.pop %v700
    %703 = vrot.lane.b32.xlu0 %v701, 32
    %v704 = vpop.permute.xlu0 %703
    %v706 = vmul.f32 %v688, %v704
    %s707 = scalar_lea.vmem [#allocation2], 40
    %v708 = vld [vmem:[%s707] sm:$0xff]
    %710 = vrot.lane.b32.xlu0 %v706, 64
    %v711 = vpop.permute.xlu0 %710
    %v712 = vsel %vm196, %v711, 0
    %714 = vmatprep.subr.mxu0 0.0
    %715 = vmatpush1.msra.mxu0 0.0
    %716 = vmatprep.subr.mxu0 0.0
    %717 = vmatpush1.msra.mxu0 0.0
    %718 = vmatprep.subr.mxu0 0.0
    %719 = vmatpush1.msra.mxu0 0.0
    %720 = vmatprep.subr.mxu0 0.0
    %721 = vmatpush1.msra.mxu0 0.0
    %722 = vmatprep.subr.mxu0 0.0
    %723 = vmatpush1.msra.mxu0 0.0
    %724 = vmatprep.subr.mxu0 0.0
    %725 = vmatpush1.msra.mxu0 0.0
    %726 = vmatprep.subr.mxu0 0.0
    %727 = vmatpush1.msra.mxu0 0.0
    %728 = vmatprep.subr.mxu0 0.0
    %729 = vmatpush1.msra.mxu0 0.0
    %730 = vmatprep.subr.mxu0 0.0
    %731 = vmatpush1.msra.mxu0 0.0
    %732 = vmatprep.subr.mxu0 0.0
    %733 = vmatpush1.msra.mxu0 0.0
    %734 = vmatprep.subr.mxu0 0.0
    %735 = vmatpush1.msra.mxu0 0.0
    %736 = vmatprep.subr.mxu0 0.0
    %737 = vmatpush1.msra.mxu0 0.0
    %738 = vmatprep.subr.mxu0 0.0
    %739 = vmatpush1.msra.mxu0 %v192
    %740 = vmatprep.subr.mxu0 0.0
    %741 = vmatpush1.msra.mxu0 %v191
    %742 = vmatprep.subr.mxu0 0.0
    %743 = vmatpush1.msra.mxu0 %v190
    %744 = vmatprep.subr.mxu0 0.0
    %745 = vmatpush1.msra.mxu0 %v189
    %746 = vmatprep.subr.mxu0 0.0
    %747 = vmatpush2.msra.mxu0 0.0
    %748 = vmatprep.subr.mxu0 0.0
    %749 = vmatpush2.msra.mxu0 0.0
    %750 = vmatprep.subr.mxu0 0.0
    %751 = vmatpush2.msra.mxu0 0.0
    %752 = vmatprep.subr.mxu0 0.0
    %753 = vmatpush2.msra.mxu0 0.0
    %754 = vmatprep.subr.mxu0 0.0
    %755 = vmatpush2.msra.mxu0 0.0
    %756 = vmatprep.subr.mxu0 0.0
    %757 = vmatpush2.msra.mxu0 0.0
    %758 = vmatprep.subr.mxu0 0.0
    %759 = vmatpush2.msra.mxu0 0.0
    %760 = vmatprep.subr.mxu0 0.0
    %761 = vmatpush2.msra.mxu0 0.0
    %762 = vmatprep.subr.mxu0 0.0
    %763 = vmatpush2.msra.mxu0 0.0
    %764 = vmatprep.subr.mxu0 0.0
    %765 = vmatpush2.msra.mxu0 0.0
    %766 = vmatprep.subr.mxu0 0.0
    %767 = vmatpush2.msra.mxu0 0.0
    %768 = vmatprep.subr.mxu0 0.0
    %769 = vmatpush2.msra.mxu0 0.0
    %770 = vmatprep.subr.mxu0 0.0
    %771 = vmatpush2.msra.mxu0 0.0
    %772 = vmatprep.subr.mxu0 0.0
    %773 = vmatpush2.msra.mxu0 0.0
    %774 = vmatprep.subr.mxu0 0.0
    %775 = vmatpush2.msra.mxu0 0.0
    %776 = vmatprep.subr.mxu0 0.0
    %777 = vmatpush2.msra.mxu0 0.0
    %778 = vmatprep.mubr.f32.mxu0 0.0
    %779 = vmatmul.mubr.f32.gmra.mxu0 %v712
    %v780 = vpop.f32.mrf.mxu0
    %v781 = vadd.f32 0.0, %v780
    %v782 = vpop.f32.mrf.mxu0
    %783 = vdwg.mxu0
    %v784 = vadd.f32 %v708, %v781
    %v785 = vxor.u32 %v784, 2147483648
    %v786 = vmul.f32 %v785, 1.442695
    %v787 = vpow.pop %v786
    %v788 = vadd.f32 %v787, 1.0
    %v789 = vrcp.pop %v788
    %v790 = vmul.f32 1.0, %v789
    %v791 = vtanh.pop %v784
    %v792 = vmul.f32 %v790, %v700
    %794 = vrot.lane.b32.xlu0 %v791, 32
    %v795 = vpop.permute.xlu0 %794
    %v797 = vmul.f32 %v790, %v795
    %799 = vrot.lane.b32.xlu0 %v797, 32
    %v800 = vpop.permute.xlu0 %799
    %v802 = vadd.f32 %v792, %v800
    %v803 = vtanh.pop %v802
    %805 = vrot.lane.b32.xlu0 %v803, 32
    %v806 = vpop.permute.xlu0 %805
    %v808 = vmul.f32 %v790, %v806
    %s809 = scalar_lea.vmem [#allocation2], 48
    %v810 = vld [vmem:[%s809] sm:$0xff]
    %812 = vrot.lane.b32.xlu0 %v808, 64
    %v813 = vpop.permute.xlu0 %812
    %v814 = vsel %vm196, %v813, 0
    %816 = vmatprep.subr.mxu0 0.0
    %817 = vmatpush1.msra.mxu0 0.0
    %818 = vmatprep.subr.mxu0 0.0
    %819 = vmatpush1.msra.mxu0 0.0
    %820 = vmatprep.subr.mxu0 0.0
    %821 = vmatpush1.msra.mxu0 0.0
    %822 = vmatprep.subr.mxu0 0.0
    %823 = vmatpush1.msra.mxu0 0.0
    %824 = vmatprep.subr.mxu0 0.0
    %825 = vmatpush1.msra.mxu0 0.0
    %826 = vmatprep.subr.mxu0 0.0
    %827 = vmatpush1.msra.mxu0 0.0
    %828 = vmatprep.subr.mxu0 0.0
    %829 = vmatpush1.msra.mxu0 0.0
    %830 = vmatprep.subr.mxu0 0.0
    %831 = vmatpush1.msra.mxu0 0.0
    %832 = vmatprep.subr.mxu0 0.0
    %833 = vmatpush1.msra.mxu0 0.0
    %834 = vmatprep.subr.mxu0 0.0
    %835 = vmatpush1.msra.mxu0 0.0
    %836 = vmatprep.subr.mxu0 0.0
    %837 = vmatpush1.msra.mxu0 0.0
    %838 = vmatprep.subr.mxu0 0.0
    %839 = vmatpush1.msra.mxu0 0.0
    %840 = vmatprep.subr.mxu0 0.0
    %841 = vmatpush1.msra.mxu0 %v192
    %842 = vmatprep.subr.mxu0 0.0
    %843 = vmatpush1.msra.mxu0 %v191
    %844 = vmatprep.subr.mxu0 0.0
    %845 = vmatpush1.msra.mxu0 %v190
    %846 = vmatprep.subr.mxu0 0.0
    %847 = vmatpush1.msra.mxu0 %v189
    %848 = vmatprep.subr.mxu0 0.0
    %849 = vmatpush2.msra.mxu0 0.0
    %850 = vmatprep.subr.mxu0 0.0
    %851 = vmatpush2.msra.mxu0 0.0
    %852 = vmatprep.subr.mxu0 0.0
    %853 = vmatpush2.msra.mxu0 0.0
    %854 = vmatprep.subr.mxu0 0.0
    %855 = vmatpush2.msra.mxu0 0.0
    %856 = vmatprep.subr.mxu0 0.0
    %857 = vmatpush2.msra.mxu0 0.0
    %858 = vmatprep.subr.mxu0 0.0
    %859 = vmatpush2.msra.mxu0 0.0
    %860 = vmatprep.subr.mxu0 0.0
    %861 = vmatpush2.msra.mxu0 0.0
    %862 = vmatprep.subr.mxu0 0.0
    %863 = vmatpush2.msra.mxu0 0.0
    %864 = vmatprep.subr.mxu0 0.0
    %865 = vmatpush2.msra.mxu0 0.0
    %866 = vmatprep.subr.mxu0 0.0
    %867 = vmatpush2.msra.mxu0 0.0
    %868 = vmatprep.subr.mxu0 0.0
    %869 = vmatpush2.msra.mxu0 0.0
    %870 = vmatprep.subr.mxu0 0.0
    %871 = vmatpush2.msra.mxu0 0.0
    %872 = vmatprep.subr.mxu0 0.0
    %873 = vmatpush2.msra.mxu0 0.0
    %874 = vmatprep.subr.mxu0 0.0
    %875 = vmatpush2.msra.mxu0 0.0
    %876 = vmatprep.subr.mxu0 0.0
    %877 = vmatpush2.msra.mxu0 0.0
    %878 = vmatprep.subr.mxu0 0.0
    %879 = vmatpush2.msra.mxu0 0.0
    %880 = vmatprep.mubr.f32.mxu0 0.0
    %881 = vmatmul.mubr.f32.gmra.mxu0 %v814
    %v882 = vpop.f32.mrf.mxu0
    %v883 = vadd.f32 0.0, %v882
    %v884 = vpop.f32.mrf.mxu0
    %885 = vdwg.mxu0
    %v886 = vadd.f32 %v810, %v883
    %v887 = vxor.u32 %v886, 2147483648
    %v888 = vmul.f32 %v887, 1.442695
    %v889 = vpow.pop %v888
    %v890 = vadd.f32 %v889, 1.0
    %v891 = vrcp.pop %v890
    %v892 = vmul.f32 1.0, %v891
    %v893 = vtanh.pop %v886
    %v894 = vmul.f32 %v892, %v802
    %896 = vrot.lane.b32.xlu0 %v893, 32
    %v897 = vpop.permute.xlu0 %896
    %v899 = vmul.f32 %v892, %v897
    %901 = vrot.lane.b32.xlu0 %v899, 32
    %v902 = vpop.permute.xlu0 %901
    %v904 = vadd.f32 %v894, %v902
    %v905 = vtanh.pop %v904
    %907 = vrot.lane.b32.xlu0 %v905, 32
    %v908 = vpop.permute.xlu0 %907
    %v910 = vmul.f32 %v892, %v908
    %s911 = scalar_lea.vmem [#allocation2], 56
    %v912 = vld [vmem:[%s911] sm:$0xff]
    %914 = vrot.lane.b32.xlu0 %v910, 64
    %v915 = vpop.permute.xlu0 %914
    %v916 = vsel %vm196, %v915, 0
    %918 = vmatprep.subr.mxu0 0.0
    %919 = vmatpush1.msra.mxu0 0.0
    %920 = vmatprep.subr.mxu0 0.0
    %921 = vmatpush1.msra.mxu0 0.0
    %922 = vmatprep.subr.mxu0 0.0
    %923 = vmatpush1.msra.mxu0 0.0
    %924 = vmatprep.subr.mxu0 0.0
    %925 = vmatpush1.msra.mxu0 0.0
    %926 = vmatprep.subr.mxu0 0.0
    %927 = vmatpush1.msra.mxu0 0.0
    %928 = vmatprep.subr.mxu0 0.0
    %929 = vmatpush1.msra.mxu0 0.0
    %930 = vmatprep.subr.mxu0 0.0
    %931 = vmatpush1.msra.mxu0 0.0
    %932 = vmatprep.subr.mxu0 0.0
    %933 = vmatpush1.msra.mxu0 0.0
    %934 = vmatprep.subr.mxu0 0.0
    %935 = vmatpush1.msra.mxu0 0.0
    %936 = vmatprep.subr.mxu0 0.0
    %937 = vmatpush1.msra.mxu0 0.0
    %938 = vmatprep.subr.mxu0 0.0
    %939 = vmatpush1.msra.mxu0 0.0
    %940 = vmatprep.subr.mxu0 0.0
    %941 = vmatpush1.msra.mxu0 0.0
    %942 = vmatprep.subr.mxu0 0.0
    %943 = vmatpush1.msra.mxu0 %v192
    %944 = vmatprep.subr.mxu0 0.0
    %945 = vmatpush1.msra.mxu0 %v191
    %946 = vmatprep.subr.mxu0 0.0
    %947 = vmatpush1.msra.mxu0 %v190
    %948 = vmatprep.subr.mxu0 0.0
    %949 = vmatpush1.msra.mxu0 %v189
    %950 = vmatprep.subr.mxu0 0.0
    %951 = vmatpush2.msra.mxu0 0.0
    %952 = vmatprep.subr.mxu0 0.0
    %953 = vmatpush2.msra.mxu0 0.0
    %954 = vmatprep.subr.mxu0 0.0
    %955 = vmatpush2.msra.mxu0 0.0
    %956 = vmatprep.subr.mxu0 0.0
    %957 = vmatpush2.msra.mxu0 0.0
    %958 = vmatprep.subr.mxu0 0.0
    %959 = vmatpush2.msra.mxu0 0.0
    %960 = vmatprep.subr.mxu0 0.0
    %961 = vmatpush2.msra.mxu0 0.0
    %962 = vmatprep.subr.mxu0 0.0
    %963 = vmatpush2.msra.mxu0 0.0
    %964 = vmatprep.subr.mxu0 0.0
    %965 = vmatpush2.msra.mxu0 0.0
    %966 = vmatprep.subr.mxu0 0.0
    %967 = vmatpush2.msra.mxu0 0.0
    %968 = vmatprep.subr.mxu0 0.0
    %969 = vmatpush2.msra.mxu0 0.0
    %970 = vmatprep.subr.mxu0 0.0
    %971 = vmatpush2.msra.mxu0 0.0
    %972 = vmatprep.subr.mxu0 0.0
    %973 = vmatpush2.msra.mxu0 0.0
    %974 = vmatprep.subr.mxu0 0.0
    %975 = vmatpush2.msra.mxu0 0.0
    %976 = vmatprep.subr.mxu0 0.0
    %977 = vmatpush2.msra.mxu0 0.0
    %978 = vmatprep.subr.mxu0 0.0
    %979 = vmatpush2.msra.mxu0 0.0
    %980 = vmatprep.subr.mxu0 0.0
    %981 = vmatpush2.msra.mxu0 0.0
    %982 = vmatprep.mubr.f32.mxu0 0.0
    %983 = vmatmul.mubr.f32.gmra.mxu0 %v916
    %v984 = vpop.f32.mrf.mxu0
    %v985 = vadd.f32 0.0, %v984
    %v986 = vpop.f32.mrf.mxu0
    %987 = vdwg.mxu0
    %v988 = vadd.f32 %v912, %v985
    %v989 = vxor.u32 %v988, 2147483648
    %v990 = vmul.f32 %v989, 1.442695
    %v991 = vpow.pop %v990
    %v992 = vadd.f32 %v991, 1.0
    %v993 = vrcp.pop %v992
    %v994 = vmul.f32 1.0, %v993
    %v995 = vtanh.pop %v988
    %v996 = vmul.f32 %v994, %v904
    %998 = vrot.lane.b32.xlu0 %v995, 32
    %v999 = vpop.permute.xlu0 %998
    %v1001 = vmul.f32 %v994, %v999
    %1003 = vrot.lane.b32.xlu0 %v1001, 32
    %v1004 = vpop.permute.xlu0 %1003
    %v1006 = vadd.f32 %v996, %v1004
    %v1007 = vtanh.pop %v1006
    %1009 = vrot.lane.b32.xlu0 %v1007, 32
    %v1010 = vpop.permute.xlu0 %1009
    %v1012 = vmul.f32 %v994, %v1010
    %1014 = vrot.lane.b32.xlu0 %v1012, 64
    %v1015 = vpop.permute.xlu0 %1014
    %1017 = vst.msk [vmem:[#allocation5] sm:$0xff] %vm196, %v1015
    %1019 = vrot.lane.b32.xlu0 %v1006, 96
    %v1020 = vpop.permute.xlu0 %1019
    %1022 = vst.msk [vmem:[#allocation7] sm:$0xff] %vm196, %v1020
    %v1023 = vld [vmem:[%s4] sm:$0xff]
    %v1024 = vld [vmem:[%s4 + $0x8] sm:$0xff]
    %v1025 = vld [vmem:[%s4 + $0x10] sm:$0xff]
    %v1026 = vld [vmem:[%s4 + $0x18] sm:$0xff]
    %v1027 = vld [vmem:[%s5] sm:$0x1]
    %v1029 = vlaneseq
    %v1030 = vshrl.u32 %v1029, 7
    %v1031 = vsub.s32 0, %v1030
    %v1032 = vrot.slane %v1027, %v1031
    %v1034 = vsel %vm196, %v1015, 0
    %1036 = vmatprep.subr.mxu0 0.0
    %1037 = vmatpush1.msra.mxu0 0.0
    %1038 = vmatprep.subr.mxu0 0.0
    %1039 = vmatpush1.msra.mxu0 0.0
    %1040 = vmatprep.subr.mxu0 0.0
    %1041 = vmatpush1.msra.mxu0 0.0
    %1042 = vmatprep.subr.mxu0 0.0
    %1043 = vmatpush1.msra.mxu0 0.0
    %1044 = vmatprep.subr.mxu0 0.0
    %1045 = vmatpush1.msra.mxu0 0.0
    %1046 = vmatprep.subr.mxu0 0.0
    %1047 = vmatpush1.msra.mxu0 0.0
    %1048 = vmatprep.subr.mxu0 0.0
    %1049 = vmatpush1.msra.mxu0 0.0
    %1050 = vmatprep.subr.mxu0 0.0
    %1051 = vmatpush1.msra.mxu0 0.0
    %1052 = vmatprep.subr.mxu0 0.0
    %1053 = vmatpush1.msra.mxu0 0.0
    %1054 = vmatprep.subr.mxu0 0.0
    %1055 = vmatpush1.msra.mxu0 0.0
    %1056 = vmatprep.subr.mxu0 0.0
    %1057 = vmatpush1.msra.mxu0 0.0
    %1058 = vmatprep.subr.mxu0 0.0
    %1059 = vmatpush1.msra.mxu0 0.0
    %1060 = vmatprep.subr.mxu0 0.0
    %1061 = vmatpush1.msra.mxu0 %v1026
    %1062 = vmatprep.subr.mxu0 0.0
    %1063 = vmatpush1.msra.mxu0 %v1025
    %1064 = vmatprep.subr.mxu0 0.0
    %1065 = vmatpush1.msra.mxu0 %v1024
    %1066 = vmatprep.subr.mxu0 0.0
    %1067 = vmatpush1.msra.mxu0 %v1023
    %1068 = vmatprep.subr.mxu0 0.0
    %1069 = vmatpush2.msra.mxu0 0.0
    %1070 = vmatprep.subr.mxu0 0.0
    %1071 = vmatpush2.msra.mxu0 0.0
    %1072 = vmatprep.subr.mxu0 0.0
    %1073 = vmatpush2.msra.mxu0 0.0
    %1074 = vmatprep.subr.mxu0 0.0
    %1075 = vmatpush2.msra.mxu0 0.0
    %1076 = vmatprep.subr.mxu0 0.0
    %1077 = vmatpush2.msra.mxu0 0.0
    %1078 = vmatprep.subr.mxu0 0.0
    %1079 = vmatpush2.msra.mxu0 0.0
    %1080 = vmatprep.subr.mxu0 0.0
    %1081 = vmatpush2.msra.mxu0 0.0
    %1082 = vmatprep.subr.mxu0 0.0
    %1083 = vmatpush2.msra.mxu0 0.0
    %1084 = vmatprep.subr.mxu0 0.0
    %1085 = vmatpush2.msra.mxu0 0.0
    %1086 = vmatprep.subr.mxu0 0.0
    %1087 = vmatpush2.msra.mxu0 0.0
    %1088 = vmatprep.subr.mxu0 0.0
    %1089 = vmatpush2.msra.mxu0 0.0
    %1090 = vmatprep.subr.mxu0 0.0
    %1091 = vmatpush2.msra.mxu0 0.0
    %1092 = vmatprep.subr.mxu0 0.0
    %1093 = vmatpush2.msra.mxu0 0.0
    %1094 = vmatprep.subr.mxu0 0.0
    %1095 = vmatpush2.msra.mxu0 0.0
    %1096 = vmatprep.subr.mxu0 0.0
    %1097 = vmatpush2.msra.mxu0 0.0
    %1098 = vmatprep.subr.mxu0 0.0
    %1099 = vmatpush2.msra.mxu0 0.0
    %1100 = vmatprep.mubr.f32.mxu0 0.0
    %1101 = vmatmul.mubr.f32.gmra.mxu0 %v1034
    %v1102 = vpop.f32.mrf.mxu0
    %v1103 = vadd.f32 %v1032, %v1102
    %v1104 = vpop.f32.mrf.mxu0
    %1105 = vdwg.mxu0
    %vm1106 = vcmask 80896
    %v1107 = vsel %vm1106, %v1103, -inf
    %1108 = vmax.xlane.f32.xlu0 %v1107
    %v1109 = vpop.xlane.xlu0 %1108
    %v1110 = vsub.f32 %v1103, %v1109
    %v1111 = vmul.f32 %v1110, 1.442695
    %v1112 = vpow.pop %v1111
    %v1113 = vsel %vm1106, %v1112, 0.0
    %1114 = vadd.xlane.f32.xlu0 %v1113
    %v1115 = vpop.xlane.xlu0 %1114
    %v1116 = vlog2.pop %v1115
    %v1117 = vmul.f32 %v1116, 0.6931472
    %v1118 = vsub.f32 %v1110, %v1117
    %1119 = vst.msk [vmem:[#allocation3] sm:$0xff] %vm1106, %v1118
    // Predicated region
    $region34: #{tpu_custom_call.1} parent=1 // pred_check
      _
    $region35: #{tpu_custom_call.1} parent=1 // pred_check_branch
      %1121 = sbr.rel (0) target = $region37
    $region36: #{tpu_custom_call.1} parent=1 // pred_region
      %s1123 = ssub.s32 128, 128
      %1124 = vsyncadd [#allocation4], %s1123
      %s1126 = sshll.u32 [#allocation3], 4
      %s1127 = int_to_ptr.vmem [resolvable:$true] %s1126
      %1129 = dma.vmem_to_hbm [thread:$0]  %s1127, 128, %s8, [#allocation4]
    $region37: #{tpu_custom_call.1} parent=1 // pred_fallthru
      _
    // Predicated region
    $region38: #{tpu_custom_call.1} parent=1 // pred_check
      _
    $region39: #{tpu_custom_call.1} parent=1 // pred_check_branch
      %1131 = sbr.rel (0) target = $region41
    $region40: #{tpu_custom_call.1} parent=1 // pred_region
      %s1133 = ssub.s32 128, 128
      %1134 = vsyncadd [#allocation6], %s1133
      %s1136 = sshll.u32 [#allocation5], 4
      %s1137 = int_to_ptr.vmem [resolvable:$true] %s1136
      %1139 = dma.vmem_to_hbm [thread:$0]  %s1137, 128, %s9, [#allocation6]
    $region41: #{tpu_custom_call.1} parent=1 // pred_fallthru
      _
    // Predicated region
    $region42: #{tpu_custom_call.1} parent=1 // pred_check
      _
    $region43: #{tpu_custom_call.1} parent=1 // pred_check_branch
      %1141 = sbr.rel (0) target = $region45
    $region44: #{tpu_custom_call.1} parent=1 // pred_region
      %s1143 = ssub.s32 128, 128
      %1144 = vsyncadd [#allocation6], %s1143
      %s1146 = sshll.u32 [#allocation7], 4
      %s1147 = int_to_ptr.vmem [resolvable:$true] %s1146
      %1149 = dma.vmem_to_hbm [thread:$0]  %s1147, 128, %s10, [#allocation6]
    $region45: #{tpu_custom_call.1} parent=1 // pred_fallthru
      _
    // Predicated region
    $region46: #{tpu_custom_call.1} parent=1 // pred_check
      _
    $region47: #{tpu_custom_call.1} parent=1 // pred_check_branch
      %1151 = sbr.rel (0) target = $region49
    $region48: #{tpu_custom_call.1} parent=1 // pred_region
      %1152 = dma.done [#allocation4], 128
    $region49: #{tpu_custom_call.1} parent=1 // pred_fallthru
      _
    // Predicated region
    $region50: #{tpu_custom_call.1} parent=1 // pred_check
      _
    $region51: #{tpu_custom_call.1} parent=1 // pred_check_branch
      %1154 = sbr.rel (0) target = $region53
    $region52: #{tpu_custom_call.1} parent=1 // pred_region
      %1155 = dma.done [#allocation6], 128
    $region53: #{tpu_custom_call.1} parent=1 // pred_fallthru
      _
    // Predicated region
    $region54: #{tpu_custom_call.1} parent=1 // pred_check
      _
    $region55: #{tpu_custom_call.1} parent=1 // pred_check_branch
      %1157 = sbr.rel (0) target = $region57
    $region56: #{tpu_custom_call.1} parent=1 // pred_region
      %1158 = dma.done [#allocation6], 128
    $region57: #{tpu_custom_call.1} parent=1 // pred_fallthru
      _
    %1159 = vsyncpa [#allocation4], 1
    %1160 = vsyncpa [#allocation6], 1

</llo_original>
